<compile_context>
chip_gen: v5e
topology: v5e:2x2
jax: 0.10.0
libtpu: 0.0.40
codegen_flags: <defaults>
</compile_context>

<pallas_src>
import math
import functools

import jax
import jax.numpy as jnp
from jax.experimental import pallas as pl
from jax.experimental.pallas import tpu as pltpu


def _min_sublanes(dtype) -> int:
    """Minimum sublane multiple for a given dtype (f32: 8, bf16: 16, int8/fp8: 32)."""
    itemsize = jnp.dtype(dtype).itemsize
    return {4: 8, 2: 16, 1: 32}.get(itemsize, 8)


def _make_decoder_kernel(T: int, H: int, P: int, O: int,
                         with_ego: bool, non_linear_output: bool):
    """Build the whole-sequence kernel body with the static config baked in."""
    S = P + H + O  # per-step output row width inside the combined slab

    def kernel(ego_ref, h0_ref, wcat_ref, whn_ref, brzn_ref, bhn_ref,
               wout_ref, bout_ref, comb_ref, xh_scr):
        # ---- hoist all weight / bias loads out of the unrolled recurrence ----
        w_cat = wcat_ref[...]      # (P+H, 3H)  x/h weights, n-gate h-columns zeroed
        w_hn = whn_ref[...]        # (H, H)     h-part of n gate (gets scaled by r)
        b_rzn = brzn_ref[...]      # (1, 3H)    [b_ir+b_hr | b_iz+b_hz | b_in]
        b_hn = bhn_ref[...]        # (1, H)
        w_out = wout_ref[...]      # (H, P+O)   [W_p2i^T | W_h2p^T]
        b_out = bout_ref[...]      # (1, P+O)

        h = h0_ref[...].astype(jnp.float32)                # (Bp, H)
        pin = jnp.zeros((h.shape[0], P), jnp.float32)      # (Bp, P) pred_inputs carry

        # Fully unrolled recurrence (T is small & static) -> single kernel invocation,
        # LLO can overlap EUP (sigmoid/tanh) with the next step's MXU pushes.
        for t in range(T):
            if with_ego:
                e = ego_ref[:, t * P:(t + 1) * P].astype(jnp.float32)
                pin = (e + pin) * 0.5

            # all_pred_inputs[:, t] = pred_inputs (pre-GRU value, as in PyTorch)
            comb_ref[:, t * S:t * S + P] = pin.astype(comb_ref.dtype)

            # ---- GRU cell, gate order [r | z | n] ----
            # One fused MXU pass computes (gi_r+gh_r, gi_z+gh_z, gi_n); a second small
            # dot gives gh_n, which must stay separate because it is scaled by r.
            xh_scr[:, :P] = pin
            xh_scr[:, P:] = h
            g = jnp.dot(xh_scr[...], w_cat,
                        preferred_element_type=jnp.float32) + b_rzn      # (Bp, 3H)
            gh_n = jnp.dot(h, w_hn,
                           preferred_element_type=jnp.float32) + b_hn    # (Bp, H)

            r = jax.nn.sigmoid(g[:, :H])
            z = jax.nn.sigmoid(g[:, H:2 * H])
            n = jnp.tanh(g[:, 2 * H:] + r * gh_n)          # b_hn stays inside r*(.)
            h = (1.0 - z) * n + z * h

            # ---- fused output projections: [hidden_to_pred_input | hidden_to_pred] ----
            ho = jnp.dot(h, w_out, preferred_element_type=jnp.float32) + b_out
            pred = ho[:, P:]
            if non_linear_output:
                pred = jnp.tanh(pred)

            comb_ref[:, t * S + P:t * S + P + H] = h.astype(comb_ref.dtype)
            comb_ref[:, t * S + P + H:(t + 1) * S] = pred.astype(comb_ref.dtype)

            # carry to next step
            pin = jnp.maximum(ho[:, :P], 0.0)              # ReLU

    return kernel


@functools.partial(jax.jit, static_argnames=("with_ego", "non_linear_output"))
def decoder_gru_forward(h, embedded_ego_pred,
                        w_ih, w_hh, b_ih, b_hh,
                        w_p2i, b_p2i, w_h2p, b_h2p,
                        *, with_ego=True, non_linear_output=True):
    """DecoderGRU.forward.

    h                 : (B, H)       encoder hidden state (dec_hidden_size == H)
    embedded_ego_pred : (B, T, P)    embedded ego predictions (P == predictor_input_size)
    w_ih, w_hh        : (3H, P), (3H, H)  GRUCell weights (PyTorch layout, gates [r|z|n])
    b_ih, b_hh        : (3H,)
    w_p2i, b_p2i      : (P, H), (P,)      hidden_to_pred_input Linear
    w_h2p, b_h2p      : (O, H), (O,)      hidden_to_pred Linear
    Returns (output (B,T,O), all_pred_h (B,T,H), all_pred_inputs (B,T,P)).
    """
    B, H = h.shape
    T = embedded_ego_pred.shape[1]
    P = w_ih.shape[1]
    O = w_h2p.shape[0]
    S = P + H + O
    dtype = h.dtype

    # ---- one-time parameter prep (amortized over the whole sequence) ----
    wih_t = jnp.transpose(w_ih)                                  # (P, 3H)
    whh_t = jnp.transpose(w_hh)                                  # (H, 3H)
    w_cat = jnp.concatenate([wih_t, whh_t.at[:, 2 * H:].set(0.0)], axis=0)   # (P+H, 3H)
    w_hn_t = whh_t[:, 2 * H:]                                    # (H, H)
    b_rzn = jnp.concatenate([b_ih[:2 * H] + b_hh[:2 * H],
                             b_ih[2 * H:]]).reshape(1, 3 * H)    # (1, 3H)
    b_hn = b_hh[2 * H:].reshape(1, H)                            # (1, H)
    w_out_t = jnp.concatenate([jnp.transpose(w_p2i),
                               jnp.transpose(w_h2p)], axis=1)    # (H, P+O)
    b_out = jnp.concatenate([b_p2i, b_h2p]).reshape(1, P + O)    # (1, P+O)

    # ---- pad batch to this dtype's sublane count; padded rows sliced off afterwards ----
    sub = _min_sublanes(dtype)
    Bp = max(sub, -(-B // sub) * sub)
    pad = Bp - B
    h_p = jnp.pad(h, ((0, pad), (0, 0)))
    ego2 = jnp.pad(embedded_ego_pred,
                   ((0, pad), (0, 0), (0, 0))).reshape(Bp, T * P)   # native layout, 2-D

    kernel = _make_decoder_kernel(T, H, P, O, with_ego, non_linear_output)

    comb = pl.pallas_call(
        kernel,
        out_shape=jax.ShapeDtypeStruct((Bp, T * S), dtype),
        # No grid: single invocation; whole arrays live in VMEM for the full sequence
        # (total footprint ~25 KB, fine on v5e/v6e/v7x).
        in_specs=[pl.BlockSpec(memory_space=pltpu.MemorySpace.VMEM)] * 8,
        out_specs=pl.BlockSpec(memory_space=pltpu.MemorySpace.VMEM),
        scratch_shapes=[pltpu.VMEM((Bp, P + H), jnp.float32)],   # [pred_inputs | h]
    )(ego2, h_p, w_cat, w_hn_t, b_rzn, b_hn, w_out_t, b_out)

    # Split the combined slab back out; these are cheap XLA slices/reshapes.
    comb = comb[:B].reshape(B, T, S)
    all_pred_inputs = comb[:, :, :P]
    all_pred_h = comb[:, :, P:P + H]
    output = comb[:, :, P + H:]
    return output, all_pred_h, all_pred_inputs


def reference_decoder_gru(h, ego, w_ih, w_hh, b_ih, b_hh,
                          w_p2i, b_p2i, w_h2p, b_h2p,
                          with_ego=True, non_linear_output=True):
    """Pure-JAX reference matching the PyTorch DecoderGRU.forward."""
    B, H = h.shape
    T = ego.shape[1]
    P = w_p2i.shape[0]
    pred_inputs = jnp.zeros((B, P), h.dtype)
    outs, hs, ins = [], [], []
    for i in range(T):
        if with_ego:
            pred_inputs = (ego[:, i, :] + pred_inputs) / 2
        ins.append(pred_inputs)
        gi = pred_inputs @ w_ih.T + b_ih
        gh = h @ w_hh.T + b_hh
        r = jax.nn.sigmoid(gi[:, :H] + gh[:, :H])
        z = jax.nn.sigmoid(gi[:, H:2 * H] + gh[:, H:2 * H])
        n = jnp.tanh(gi[:, 2 * H:] + r * gh[:, 2 * H:])
        h = (1.0 - z) * n + z * h
        pred_inputs = jax.nn.relu(h @ w_p2i.T + b_p2i)
        hs.append(h)
        o = h @ w_h2p.T + b_h2p
        if non_linear_output:
            o = jnp.tanh(o)
        outs.append(o)
    return (jnp.stack(outs, axis=1), jnp.stack(hs, axis=1), jnp.stack(ins, axis=1))


if __name__ == "__main__":
    # args: dec_hidden_size=32, predictor_input_size=input_embed_size=16,
    #       pred_dim=8, pred_timesteps=8, with_ego=True, non_linear_output=True
    B, T, H, P, O = 2, 8, 32, 16, 8

    key = jax.random.PRNGKey(0)
    ks = jax.random.split(key, 10)

    h0 = jax.random.normal(ks[0], (B, H), dtype=jnp.float32)
    ego = jax.random.normal(ks[1], (B, T, P), dtype=jnp.float32)

    bound = 1.0 / math.sqrt(H)
    w_ih = jax.random.uniform(ks[2], (3 * H, P), minval=-bound, maxval=bound, dtype=jnp.float32)
    w_hh = jax.random.uniform(ks[3], (3 * H, H), minval=-bound, maxval=bound, dtype=jnp.float32)
    b_ih = jax.random.uniform(ks[4], (3 * H,), minval=-bound, maxval=bound, dtype=jnp.float32)
    b_hh = jax.random.uniform(ks[5], (3 * H,), minval=-bound, maxval=bound, dtype=jnp.float32)
    w_p2i = jax.random.uniform(ks[6], (P, H), minval=-bound, maxval=bound, dtype=jnp.float32)
    b_p2i = jax.random.uniform(ks[7], (P,), minval=-bound, maxval=bound, dtype=jnp.float32)
    w_h2p = jax.random.uniform(ks[8], (O, H), minval=-bound, maxval=bound, dtype=jnp.float32)
    b_h2p = jax.random.uniform(ks[9], (O,), minval=-bound, maxval=bound, dtype=jnp.float32)

    out, all_h, all_in = decoder_gru_forward(
        h0, ego, w_ih, w_hh, b_ih, b_hh, w_p2i, b_p2i, w_h2p, b_h2p,
        with_ego=True, non_linear_output=True)
    out = jax.block_until_ready(out)

    out_r, all_h_r, all_in_r = reference_decoder_gru(
        h0, ego, w_ih, w_hh, b_ih, b_hh, w_p2i, b_p2i, w_h2p, b_h2p,
        with_ego=True, non_linear_output=True)

    assert out.shape == (B, T, O) and all_h.shape == (B, T, H) and all_in.shape == (B, T, P)
    assert jnp.allclose(out, out_r, atol=1e-4, rtol=1e-4), "output mismatch vs reference"
    assert jnp.allclose(all_h, all_h_r, atol=1e-4, rtol=1e-4), "all_pred_h mismatch vs reference"
    assert jnp.allclose(all_in, all_in_r, atol=1e-4, rtol=1e-4), "all_pred_inputs mismatch vs reference"

    print("KERNEL_OK")
</pallas_src>

<mosaic_0001>
module attributes {stable_mosaic.version = 11 : i64} {
  func.func @kernel(%arg0: memref<8x128xf32, #tpu.memory_space<vmem>>, %arg1: memref<8x32xf32, #tpu.memory_space<vmem>>, %arg2: memref<48x96xf32, #tpu.memory_space<vmem>>, %arg3: memref<32x32xf32, #tpu.memory_space<vmem>>, %arg4: memref<1x96xf32, #tpu.memory_space<vmem>>, %arg5: memref<1x32xf32, #tpu.memory_space<vmem>>, %arg6: memref<32x24xf32, #tpu.memory_space<vmem>>, %arg7: memref<1x24xf32, #tpu.memory_space<vmem>>, %arg8: memref<8x448xf32, #tpu.memory_space<vmem>>, %arg9: memref<8x48xf32, #tpu.memory_space<vmem>>) attributes {dimension_semantics = [], scalar_prefetch = 0 : i64, scratch_operands = 1 : i64, tpu.core_type = #tpu.core_type<tc>} {
    %c0 = arith.constant 0 : index
    %c0_0 = arith.constant 0 : index
    %0 = vector.load %arg2[%c0, %c0_0] : memref<48x96xf32, #tpu.memory_space<vmem>>, vector<48x96xf32>
    %c0_1 = arith.constant 0 : index
    %c0_2 = arith.constant 0 : index
    %1 = vector.load %arg3[%c0_1, %c0_2] : memref<32x32xf32, #tpu.memory_space<vmem>>, vector<32x32xf32>
    %c0_3 = arith.constant 0 : index
    %c0_4 = arith.constant 0 : index
    %2 = vector.load %arg4[%c0_3, %c0_4] : memref<1x96xf32, #tpu.memory_space<vmem>>, vector<1x96xf32>
    %c0_5 = arith.constant 0 : index
    %c0_6 = arith.constant 0 : index
    %3 = vector.load %arg5[%c0_5, %c0_6] : memref<1x32xf32, #tpu.memory_space<vmem>>, vector<1x32xf32>
    %c0_7 = arith.constant 0 : index
    %c0_8 = arith.constant 0 : index
    %4 = vector.load %arg6[%c0_7, %c0_8] : memref<32x24xf32, #tpu.memory_space<vmem>>, vector<32x24xf32>
    %c0_9 = arith.constant 0 : index
    %c0_10 = arith.constant 0 : index
    %5 = vector.load %arg7[%c0_9, %c0_10] : memref<1x24xf32, #tpu.memory_space<vmem>>, vector<1x24xf32>
    %c0_11 = arith.constant 0 : index
    %c0_12 = arith.constant 0 : index
    %6 = vector.load %arg1[%c0_11, %c0_12] : memref<8x32xf32, #tpu.memory_space<vmem>>, vector<8x32xf32>
    %cst = arith.constant 0.000000e+00 : f32
    %7 = vector.broadcast %cst : f32 to vector<8x16xf32>
    %c0_13 = arith.constant 0 : index
    %c0_14 = arith.constant 0 : index
    %8 = vector.load %arg0[%c0_13, %c0_14] : memref<8x128xf32, #tpu.memory_space<vmem>>, vector<8x16xf32>
    %9 = arith.addf %8, %7 : vector<8x16xf32>
    %cst_15 = arith.constant 5.000000e-01 : f32
    %10 = vector.broadcast %cst_15 : f32 to vector<8x16xf32>
    %11 = arith.mulf %9, %10 : vector<8x16xf32>
    %c0_16 = arith.constant 0 : index
    %c0_17 = arith.constant 0 : index
    %12 = vector.load %arg8[%c0_16, %c0_17] : memref<8x448xf32, #tpu.memory_space<vmem>>, vector<8x16xf32>
    tpu.vector_store %arg8[%c0_16, %c0_17], %11 {strides = array<i32>} : memref<8x448xf32, #tpu.memory_space<vmem>>, vector<8x16xf32>,
    %c0_18 = arith.constant 0 : index
    %c0_19 = arith.constant 0 : index
    %13 = vector.load %arg9[%c0_18, %c0_19] : memref<8x48xf32, #tpu.memory_space<vmem>>, vector<8x16xf32>
    tpu.vector_store %arg9[%c0_18, %c0_19], %11 {strides = array<i32>} : memref<8x48xf32, #tpu.memory_space<vmem>>, vector<8x16xf32>,
    %c0_20 = arith.constant 0 : index
    %c16 = arith.constant 16 : index
    %14 = vector.load %arg9[%c0_20, %c16] : memref<8x48xf32, #tpu.memory_space<vmem>>, vector<8x32xf32>
    tpu.vector_store %arg9[%c0_20, %c16], %6 {strides = array<i32>} : memref<8x48xf32, #tpu.memory_space<vmem>>, vector<8x32xf32>,
    %c0_21 = arith.constant 0 : index
    %c0_22 = arith.constant 0 : index
    %15 = vector.load %arg9[%c0_21, %c0_22] : memref<8x48xf32, #tpu.memory_space<vmem>>, vector<8x48xf32>
    %cst_23 = arith.constant dense<0.000000e+00> : vector<8x96xf32>
    %16 = tpu.matmul %15, %0, %cst_23 {dimension_numbers = #tpu.dot_dimension_numbers<[1], [0], [0], [1], [0, 0, 1, 1], [], []>} : vector<8x48xf32>, vector<48x96xf32>, vector<8x96xf32> -> vector<8x96xf32>
    %17 = vector.broadcast %2 : vector<1x96xf32> to vector<8x96xf32>
    %18 = arith.addf %16, %17 : vector<8x96xf32>
    %cst_24 = arith.constant dense<0.000000e+00> : vector<8x32xf32>
    %19 = tpu.matmul %6, %1, %cst_24 {dimension_numbers = #tpu.dot_dimension_numbers<[1], [0], [0], [1], [0, 0, 1, 1], [], []>} : vector<8x32xf32>, vector<32x32xf32>, vector<8x32xf32> -> vector<8x32xf32>
    %20 = vector.broadcast %3 : vector<1x32xf32> to vector<8x32xf32>
    %21 = arith.addf %19, %20 : vector<8x32xf32>
    %22 = vector.extract_strided_slice %18 {offsets = [0, 0], sizes = [8, 32], strides = [1, 1]} : vector<8x96xf32> to vector<8x32xf32>
    %23 = arith.negf %22 : vector<8x32xf32>
    %24 = math.exp %23 : vector<8x32xf32>
    %cst_25 = arith.constant 1.000000e+00 : f32
    %25 = vector.broadcast %cst_25 : f32 to vector<8x32xf32>
    %26 = arith.addf %25, %24 : vector<8x32xf32>
    %27 = arith.divf %25, %26 : vector<8x32xf32>
    %28 = vector.extract_strided_slice %18 {offsets = [0, 32], sizes = [8, 32], strides = [1, 1]} : vector<8x96xf32> to vector<8x32xf32>
    %29 = arith.negf %28 : vector<8x32xf32>
    %30 = math.exp %29 : vector<8x32xf32>
    %cst_26 = arith.constant 1.000000e+00 : f32
    %31 = vector.broadcast %cst_26 : f32 to vector<8x32xf32>
    %32 = arith.addf %31, %30 : vector<8x32xf32>
    %33 = arith.divf %31, %32 : vector<8x32xf32>
    %34 = vector.extract_strided_slice %18 {offsets = [0, 64], sizes = [8, 32], strides = [1, 1]} : vector<8x96xf32> to vector<8x32xf32>
    %35 = arith.mulf %27, %21 : vector<8x32xf32>
    %36 = arith.addf %34, %35 : vector<8x32xf32>
    %37 = math.tanh %36 : vector<8x32xf32>
    %cst_27 = arith.constant 1.000000e+00 : f32
    %38 = vector.broadcast %cst_27 : f32 to vector<8x32xf32>
    %39 = arith.subf %38, %33 : vector<8x32xf32>
    %40 = arith.mulf %39, %37 : vector<8x32xf32>
    %41 = arith.mulf %33, %6 : vector<8x32xf32>
    %42 = arith.addf %40, %41 : vector<8x32xf32>
    %cst_28 = arith.constant dense<0.000000e+00> : vector<8x24xf32>
    %43 = tpu.matmul %42, %4, %cst_28 {dimension_numbers = #tpu.dot_dimension_numbers<[1], [0], [0], [1], [0, 0, 1, 1], [], []>} : vector<8x32xf32>, vector<32x24xf32>, vector<8x24xf32> -> vector<8x24xf32>
    %44 = vector.broadcast %5 : vector<1x24xf32> to vector<8x24xf32>
    %45 = arith.addf %43, %44 : vector<8x24xf32>
    %46 = vector.extract_strided_slice %45 {offsets = [0, 16], sizes = [8, 8], strides = [1, 1]} : vector<8x24xf32> to vector<8x8xf32>
    %47 = math.tanh %46 : vector<8x8xf32>
    %c0_29 = arith.constant 0 : index
    %c16_30 = arith.constant 16 : index
    %48 = vector.load %arg8[%c0_29, %c16_30] : memref<8x448xf32, #tpu.memory_space<vmem>>, vector<8x32xf32>
    tpu.vector_store %arg8[%c0_29, %c16_30], %42 {strides = array<i32>} : memref<8x448xf32, #tpu.memory_space<vmem>>, vector<8x32xf32>,
    %c0_31 = arith.constant 0 : index
    %c48 = arith.constant 48 : index
    %49 = vector.load %arg8[%c0_31, %c48] : memref<8x448xf32, #tpu.memory_space<vmem>>, vector<8x8xf32>
    tpu.vector_store %arg8[%c0_31, %c48], %47 {strides = array<i32>} : memref<8x448xf32, #tpu.memory_space<vmem>>, vector<8x8xf32>,
    %50 = vector.extract_strided_slice %45 {offsets = [0, 0], sizes = [8, 16], strides = [1, 1]} : vector<8x24xf32> to vector<8x16xf32>
    %cst_32 = arith.constant 0.000000e+00 : f32
    %51 = vector.broadcast %cst_32 : f32 to vector<8x16xf32>
    %52 = arith.maximumf %50, %51 : vector<8x16xf32>
    %c0_33 = arith.constant 0 : index
    %c16_34 = arith.constant 16 : index
    %53 = vector.load %arg0[%c0_33, %c16_34] : memref<8x128xf32, #tpu.memory_space<vmem>>, vector<8x16xf32>
    %54 = arith.addf %53, %52 : vector<8x16xf32>
    %cst_35 = arith.constant 5.000000e-01 : f32
    %55 = vector.broadcast %cst_35 : f32 to vector<8x16xf32>
    %56 = arith.mulf %54, %55 : vector<8x16xf32>
    %c0_36 = arith.constant 0 : index
    %c56 = arith.constant 56 : index
    %57 = vector.load %arg8[%c0_36, %c56] : memref<8x448xf32, #tpu.memory_space<vmem>>, vector<8x16xf32>
    tpu.vector_store %arg8[%c0_36, %c56], %56 {strides = array<i32>} : memref<8x448xf32, #tpu.memory_space<vmem>>, vector<8x16xf32>,
    %c0_37 = arith.constant 0 : index
    %c0_38 = arith.constant 0 : index
    %58 = vector.load %arg9[%c0_37, %c0_38] : memref<8x48xf32, #tpu.memory_space<vmem>>, vector<8x16xf32>
    tpu.vector_store %arg9[%c0_37, %c0_38], %56 {strides = array<i32>} : memref<8x48xf32, #tpu.memory_space<vmem>>, vector<8x16xf32>,
    %c0_39 = arith.constant 0 : index
    %c16_40 = arith.constant 16 : index
    %59 = vector.load %arg9[%c0_39, %c16_40] : memref<8x48xf32, #tpu.memory_space<vmem>>, vector<8x32xf32>
    tpu.vector_store %arg9[%c0_39, %c16_40], %42 {strides = array<i32>} : memref<8x48xf32, #tpu.memory_space<vmem>>, vector<8x32xf32>,
    %c0_41 = arith.constant 0 : index
    %c0_42 = arith.constant 0 : index
    %60 = vector.load %arg9[%c0_41, %c0_42] : memref<8x48xf32, #tpu.memory_space<vmem>>, vector<8x48xf32>
    %cst_43 = arith.constant dense<0.000000e+00> : vector<8x96xf32>
    %61 = tpu.matmul %60, %0, %cst_43 {dimension_numbers = #tpu.dot_dimension_numbers<[1], [0], [0], [1], [0, 0, 1, 1], [], []>} : vector<8x48xf32>, vector<48x96xf32>, vector<8x96xf32> -> vector<8x96xf32>
    %62 = vector.broadcast %2 : vector<1x96xf32> to vector<8x96xf32>
    %63 = arith.addf %61, %62 : vector<8x96xf32>
    %cst_44 = arith.constant dense<0.000000e+00> : vector<8x32xf32>
    %64 = tpu.matmul %42, %1, %cst_44 {dimension_numbers = #tpu.dot_dimension_numbers<[1], [0], [0], [1], [0, 0, 1, 1], [], []>} : vector<8x32xf32>, vector<32x32xf32>, vector<8x32xf32> -> vector<8x32xf32>
    %65 = vector.broadcast %3 : vector<1x32xf32> to vector<8x32xf32>
    %66 = arith.addf %64, %65 : vector<8x32xf32>
    %67 = vector.extract_strided_slice %63 {offsets = [0, 0], sizes = [8, 32], strides = [1, 1]} : vector<8x96xf32> to vector<8x32xf32>
    %68 = arith.negf %67 : vector<8x32xf32>
    %69 = math.exp %68 : vector<8x32xf32>
    %cst_45 = arith.constant 1.000000e+00 : f32
    %70 = vector.broadcast %cst_45 : f32 to vector<8x32xf32>
    %71 = arith.addf %70, %69 : vector<8x32xf32>
    %72 = arith.divf %70, %71 : vector<8x32xf32>
    %73 = vector.extract_strided_slice %63 {offsets = [0, 32], sizes = [8, 32], strides = [1, 1]} : vector<8x96xf32> to vector<8x32xf32>
    %74 = arith.negf %73 : vector<8x32xf32>
    %75 = math.exp %74 : vector<8x32xf32>
    %cst_46 = arith.constant 1.000000e+00 : f32
    %76 = vector.broadcast %cst_46 : f32 to vector<8x32xf32>
    %77 = arith.addf %76, %75 : vector<8x32xf32>
    %78 = arith.divf %76, %77 : vector<8x32xf32>
    %79 = vector.extract_strided_slice %63 {offsets = [0, 64], sizes = [8, 32], strides = [1, 1]} : vector<8x96xf32> to vector<8x32xf32>
    %80 = arith.mulf %72, %66 : vector<8x32xf32>
    %81 = arith.addf %79, %80 : vector<8x32xf32>
    %82 = math.tanh %81 : vector<8x32xf32>
    %cst_47 = arith.constant 1.000000e+00 : f32
    %83 = vector.broadcast %cst_47 : f32 to vector<8x32xf32>
    %84 = arith.subf %83, %78 : vector<8x32xf32>
    %85 = arith.mulf %84, %82 : vector<8x32xf32>
    %86 = arith.mulf %78, %42 : vector<8x32xf32>
    %87 = arith.addf %85, %86 : vector<8x32xf32>
    %cst_48 = arith.constant dense<0.000000e+00> : vector<8x24xf32>
    %88 = tpu.matmul %87, %4, %cst_48 {dimension_numbers = #tpu.dot_dimension_numbers<[1], [0], [0], [1], [0, 0, 1, 1], [], []>} : vector<8x32xf32>, vector<32x24xf32>, vector<8x24xf32> -> vector<8x24xf32>
    %89 = vector.broadcast %5 : vector<1x24xf32> to vector<8x24xf32>
    %90 = arith.addf %88, %89 : vector<8x24xf32>
    %91 = vector.extract_strided_slice %90 {offsets = [0, 16], sizes = [8, 8], strides = [1, 1]} : vector<8x24xf32> to vector<8x8xf32>
    %92 = math.tanh %91 : vector<8x8xf32>
    %c0_49 = arith.constant 0 : index
    %c72 = arith.constant 72 : index
    %93 = vector.load %arg8[%c0_49, %c72] : memref<8x448xf32, #tpu.memory_space<vmem>>, vector<8x32xf32>
    tpu.vector_store %arg8[%c0_49, %c72], %87 {strides = array<i32>} : memref<8x448xf32, #tpu.memory_space<vmem>>, vector<8x32xf32>,
    %c0_50 = arith.constant 0 : index
    %c104 = arith.constant 104 : index
    %94 = vector.load %arg8[%c0_50, %c104] : memref<8x448xf32, #tpu.memory_space<vmem>>, vector<8x8xf32>
    tpu.vector_store %arg8[%c0_50, %c104], %92 {strides = array<i32>} : memref<8x448xf32, #tpu.memory_space<vmem>>, vector<8x8xf32>,
    %95 = vector.extract_strided_slice %90 {offsets = [0, 0], sizes = [8, 16], strides = [1, 1]} : vector<8x24xf32> to vector<8x16xf32>
    %cst_51 = arith.constant 0.000000e+00 : f32
    %96 = vector.broadcast %cst_51 : f32 to vector<8x16xf32>
    %97 = arith.maximumf %95, %96 : vector<8x16xf32>
    %c0_52 = arith.constant 0 : index
    %c32 = arith.constant 32 : index
    %98 = vector.load %arg0[%c0_52, %c32] : memref<8x128xf32, #tpu.memory_space<vmem>>, vector<8x16xf32>
    %99 = arith.addf %98, %97 : vector<8x16xf32>
    %cst_53 = arith.constant 5.000000e-01 : f32
    %100 = vector.broadcast %cst_53 : f32 to vector<8x16xf32>
    %101 = arith.mulf %99, %100 : vector<8x16xf32>
    %c0_54 = arith.constant 0 : index
    %c112 = arith.constant 112 : index
    %102 = vector.load %arg8[%c0_54, %c112] : memref<8x448xf32, #tpu.memory_space<vmem>>, vector<8x16xf32>
    tpu.vector_store %arg8[%c0_54, %c112], %101 {strides = array<i32>} : memref<8x448xf32, #tpu.memory_space<vmem>>, vector<8x16xf32>,
    %c0_55 = arith.constant 0 : index
    %c0_56 = arith.constant 0 : index
    %103 = vector.load %arg9[%c0_55, %c0_56] : memref<8x48xf32, #tpu.memory_space<vmem>>, vector<8x16xf32>
    tpu.vector_store %arg9[%c0_55, %c0_56], %101 {strides = array<i32>} : memref<8x48xf32, #tpu.memory_space<vmem>>, vector<8x16xf32>,
    %c0_57 = arith.constant 0 : index
    %c16_58 = arith.constant 16 : index
    %104 = vector.load %arg9[%c0_57, %c16_58] : memref<8x48xf32, #tpu.memory_space<vmem>>, vector<8x32xf32>
    tpu.vector_store %arg9[%c0_57, %c16_58], %87 {strides = array<i32>} : memref<8x48xf32, #tpu.memory_space<vmem>>, vector<8x32xf32>,
    %c0_59 = arith.constant 0 : index
    %c0_60 = arith.constant 0 : index
    %105 = vector.load %arg9[%c0_59, %c0_60] : memref<8x48xf32, #tpu.memory_space<vmem>>, vector<8x48xf32>
    %cst_61 = arith.constant dense<0.000000e+00> : vector<8x96xf32>
    %106 = tpu.matmul %105, %0, %cst_61 {dimension_numbers = #tpu.dot_dimension_numbers<[1], [0], [0], [1], [0, 0, 1, 1], [], []>} : vector<8x48xf32>, vector<48x96xf32>, vector<8x96xf32> -> vector<8x96xf32>
    %107 = vector.broadcast %2 : vector<1x96xf32> to vector<8x96xf32>
    %108 = arith.addf %106, %107 : vector<8x96xf32>
    %cst_62 = arith.constant dense<0.000000e+00> : vector<8x32xf32>
    %109 = tpu.matmul %87, %1, %cst_62 {dimension_numbers = #tpu.dot_dimension_numbers<[1], [0], [0], [1], [0, 0, 1, 1], [], []>} : vector<8x32xf32>, vector<32x32xf32>, vector<8x32xf32> -> vector<8x32xf32>
    %110 = vector.broadcast %3 : vector<1x32xf32> to vector<8x32xf32>
    %111 = arith.addf %109, %110 : vector<8x32xf32>
    %112 = vector.extract_strided_slice %108 {offsets = [0, 0], sizes = [8, 32], strides = [1, 1]} : vector<8x96xf32> to vector<8x32xf32>
    %113 = arith.negf %112 : vector<8x32xf32>
    %114 = math.exp %113 : vector<8x32xf32>
    %cst_63 = arith.constant 1.000000e+00 : f32
    %115 = vector.broadcast %cst_63 : f32 to vector<8x32xf32>
    %116 = arith.addf %115, %114 : vector<8x32xf32>
    %117 = arith.divf %115, %116 : vector<8x32xf32>
    %118 = vector.extract_strided_slice %108 {offsets = [0, 32], sizes = [8, 32], strides = [1, 1]} : vector<8x96xf32> to vector<8x32xf32>
    %119 = arith.negf %118 : vector<8x32xf32>
    %120 = math.exp %119 : vector<8x32xf32>
    %cst_64 = arith.constant 1.000000e+00 : f32
    %121 = vector.broadcast %cst_64 : f32 to vector<8x32xf32>
    %122 = arith.addf %121, %120 : vector<8x32xf32>
    %123 = arith.divf %121, %122 : vector<8x32xf32>
    %124 = vector.extract_strided_slice %108 {offsets = [0, 64], sizes = [8, 32], strides = [1, 1]} : vector<8x96xf32> to vector<8x32xf32>
    %125 = arith.mulf %117, %111 : vector<8x32xf32>
    %126 = arith.addf %124, %125 : vector<8x32xf32>
    %127 = math.tanh %126 : vector<8x32xf32>
    %cst_65 = arith.constant 1.000000e+00 : f32
    %128 = vector.broadcast %cst_65 : f32 to vector<8x32xf32>
    %129 = arith.subf %128, %123 : vector<8x32xf32>
    %130 = arith.mulf %129, %127 : vector<8x32xf32>
    %131 = arith.mulf %123, %87 : vector<8x32xf32>
    %132 = arith.addf %130, %131 : vector<8x32xf32>
    %cst_66 = arith.constant dense<0.000000e+00> : vector<8x24xf32>
    %133 = tpu.matmul %132, %4, %cst_66 {dimension_numbers = #tpu.dot_dimension_numbers<[1], [0], [0], [1], [0, 0, 1, 1], [], []>} : vector<8x32xf32>, vector<32x24xf32>, vector<8x24xf32> -> vector<8x24xf32>
    %134 = vector.broadcast %5 : vector<1x24xf32> to vector<8x24xf32>
    %135 = arith.addf %133, %134 : vector<8x24xf32>
    %136 = vector.extract_strided_slice %135 {offsets = [0, 16], sizes = [8, 8], strides = [1, 1]} : vector<8x24xf32> to vector<8x8xf32>
    %137 = math.tanh %136 : vector<8x8xf32>
    %c0_67 = arith.constant 0 : index
    %c128 = arith.constant 128 : index
    %138 = vector.load %arg8[%c0_67, %c128] : memref<8x448xf32, #tpu.memory_space<vmem>>, vector<8x32xf32>
    tpu.vector_store %arg8[%c0_67, %c128], %132 {strides = array<i32>} : memref<8x448xf32, #tpu.memory_space<vmem>>, vector<8x32xf32>,
    %c0_68 = arith.constant 0 : index
    %c160 = arith.constant 160 : index
    %139 = vector.load %arg8[%c0_68, %c160] : memref<8x448xf32, #tpu.memory_space<vmem>>, vector<8x8xf32>
    tpu.vector_store %arg8[%c0_68, %c160], %137 {strides = array<i32>} : memref<8x448xf32, #tpu.memory_space<vmem>>, vector<8x8xf32>,
    %140 = vector.extract_strided_slice %135 {offsets = [0, 0], sizes = [8, 16], strides = [1, 1]} : vector<8x24xf32> to vector<8x16xf32>
    %cst_69 = arith.constant 0.000000e+00 : f32
    %141 = vector.broadcast %cst_69 : f32 to vector<8x16xf32>
    %142 = arith.maximumf %140, %141 : vector<8x16xf32>
    %c0_70 = arith.constant 0 : index
    %c48_71 = arith.constant 48 : index
    %143 = vector.load %arg0[%c0_70, %c48_71] : memref<8x128xf32, #tpu.memory_space<vmem>>, vector<8x16xf32>
    %144 = arith.addf %143, %142 : vector<8x16xf32>
    %cst_72 = arith.constant 5.000000e-01 : f32
    %145 = vector.broadcast %cst_72 : f32 to vector<8x16xf32>
    %146 = arith.mulf %144, %145 : vector<8x16xf32>
    %c0_73 = arith.constant 0 : index
    %c168 = arith.constant 168 : index
    %147 = vector.load %arg8[%c0_73, %c168] : memref<8x448xf32, #tpu.memory_space<vmem>>, vector<8x16xf32>
    tpu.vector_store %arg8[%c0_73, %c168], %146 {strides = array<i32>} : memref<8x448xf32, #tpu.memory_space<vmem>>, vector<8x16xf32>,
    %c0_74 = arith.constant 0 : index
    %c0_75 = arith.constant 0 : index
    %148 = vector.load %arg9[%c0_74, %c0_75] : memref<8x48xf32, #tpu.memory_space<vmem>>, vector<8x16xf32>
    tpu.vector_store %arg9[%c0_74, %c0_75], %146 {strides = array<i32>} : memref<8x48xf32, #tpu.memory_space<vmem>>, vector<8x16xf32>,
    %c0_76 = arith.constant 0 : index
    %c16_77 = arith.constant 16 : index
    %149 = vector.load %arg9[%c0_76, %c16_77] : memref<8x48xf32, #tpu.memory_space<vmem>>, vector<8x32xf32>
    tpu.vector_store %arg9[%c0_76, %c16_77], %132 {strides = array<i32>} : memref<8x48xf32, #tpu.memory_space<vmem>>, vector<8x32xf32>,
    %c0_78 = arith.constant 0 : index
    %c0_79 = arith.constant 0 : index
    %150 = vector.load %arg9[%c0_78, %c0_79] : memref<8x48xf32, #tpu.memory_space<vmem>>, vector<8x48xf32>
    %cst_80 = arith.constant dense<0.000000e+00> : vector<8x96xf32>
    %151 = tpu.matmul %150, %0, %cst_80 {dimension_numbers = #tpu.dot_dimension_numbers<[1], [0], [0], [1], [0, 0, 1, 1], [], []>} : vector<8x48xf32>, vector<48x96xf32>, vector<8x96xf32> -> vector<8x96xf32>
    %152 = vector.broadcast %2 : vector<1x96xf32> to vector<8x96xf32>
    %153 = arith.addf %151, %152 : vector<8x96xf32>
    %cst_81 = arith.constant dense<0.000000e+00> : vector<8x32xf32>
    %154 = tpu.matmul %132, %1, %cst_81 {dimension_numbers = #tpu.dot_dimension_numbers<[1], [0], [0], [1], [0, 0, 1, 1], [], []>} : vector<8x32xf32>, vector<32x32xf32>, vector<8x32xf32> -> vector<8x32xf32>
    %155 = vector.broadcast %3 : vector<1x32xf32> to vector<8x32xf32>
    %156 = arith.addf %154, %155 : vector<8x32xf32>
    %157 = vector.extract_strided_slice %153 {offsets = [0, 0], sizes = [8, 32], strides = [1, 1]} : vector<8x96xf32> to vector<8x32xf32>
    %158 = arith.negf %157 : vector<8x32xf32>
    %159 = math.exp %158 : vector<8x32xf32>
    %cst_82 = arith.constant 1.000000e+00 : f32
    %160 = vector.broadcast %cst_82 : f32 to vector<8x32xf32>
    %161 = arith.addf %160, %159 : vector<8x32xf32>
    %162 = arith.divf %160, %161 : vector<8x32xf32>
    %163 = vector.extract_strided_slice %153 {offsets = [0, 32], sizes = [8, 32], strides = [1, 1]} : vector<8x96xf32> to vector<8x32xf32>
    %164 = arith.negf %163 : vector<8x32xf32>
    %165 = math.exp %164 : vector<8x32xf32>
    %cst_83 = arith.constant 1.000000e+00 : f32
    %166 = vector.broadcast %cst_83 : f32 to vector<8x32xf32>
    %167 = arith.addf %166, %165 : vector<8x32xf32>
    %168 = arith.divf %166, %167 : vector<8x32xf32>
    %169 = vector.extract_strided_slice %153 {offsets = [0, 64], sizes = [8, 32], strides = [1, 1]} : vector<8x96xf32> to vector<8x32xf32>
    %170 = arith.mulf %162, %156 : vector<8x32xf32>
    %171 = arith.addf %169, %170 : vector<8x32xf32>
    %172 = math.tanh %171 : vector<8x32xf32>
    %cst_84 = arith.constant 1.000000e+00 : f32
    %173 = vector.broadcast %cst_84 : f32 to vector<8x32xf32>
    %174 = arith.subf %173, %168 : vector<8x32xf32>
    %175 = arith.mulf %174, %172 : vector<8x32xf32>
    %176 = arith.mulf %168, %132 : vector<8x32xf32>
    %177 = arith.addf %175, %176 : vector<8x32xf32>
    %cst_85 = arith.constant dense<0.000000e+00> : vector<8x24xf32>
    %178 = tpu.matmul %177, %4, %cst_85 {dimension_numbers = #tpu.dot_dimension_numbers<[1], [0], [0], [1], [0, 0, 1, 1], [], []>} : vector<8x32xf32>, vector<32x24xf32>, vector<8x24xf32> -> vector<8x24xf32>
    %179 = vector.broadcast %5 : vector<1x24xf32> to vector<8x24xf32>
    %180 = arith.addf %178, %179 : vector<8x24xf32>
    %181 = vector.extract_strided_slice %180 {offsets = [0, 16], sizes = [8, 8], strides = [1, 1]} : vector<8x24xf32> to vector<8x8xf32>
    %182 = math.tanh %181 : vector<8x8xf32>
    %c0_86 = arith.constant 0 : index
    %c184 = arith.constant 184 : index
    %183 = vector.load %arg8[%c0_86, %c184] : memref<8x448xf32, #tpu.memory_space<vmem>>, vector<8x32xf32>
    tpu.vector_store %arg8[%c0_86, %c184], %177 {strides = array<i32>} : memref<8x448xf32, #tpu.memory_space<vmem>>, vector<8x32xf32>,
    %c0_87 = arith.constant 0 : index
    %c216 = arith.constant 216 : index
    %184 = vector.load %arg8[%c0_87, %c216] : memref<8x448xf32, #tpu.memory_space<vmem>>, vector<8x8xf32>
    tpu.vector_store %arg8[%c0_87, %c216], %182 {strides = array<i32>} : memref<8x448xf32, #tpu.memory_space<vmem>>, vector<8x8xf32>,
    %185 = vector.extract_strided_slice %180 {offsets = [0, 0], sizes = [8, 16], strides = [1, 1]} : vector<8x24xf32> to vector<8x16xf32>
    %cst_88 = arith.constant 0.000000e+00 : f32
    %186 = vector.broadcast %cst_88 : f32 to vector<8x16xf32>
    %187 = arith.maximumf %185, %186 : vector<8x16xf32>
    %c0_89 = arith.constant 0 : index
    %c64 = arith.constant 64 : index
    %188 = vector.load %arg0[%c0_89, %c64] : memref<8x128xf32, #tpu.memory_space<vmem>>, vector<8x16xf32>
    %189 = arith.addf %188, %187 : vector<8x16xf32>
    %cst_90 = arith.constant 5.000000e-01 : f32
    %190 = vector.broadcast %cst_90 : f32 to vector<8x16xf32>
    %191 = arith.mulf %189, %190 : vector<8x16xf32>
    %c0_91 = arith.constant 0 : index
    %c224 = arith.constant 224 : index
    %192 = vector.load %arg8[%c0_91, %c224] : memref<8x448xf32, #tpu.memory_space<vmem>>, vector<8x16xf32>
    tpu.vector_store %arg8[%c0_91, %c224], %191 {strides = array<i32>} : memref<8x448xf32, #tpu.memory_space<vmem>>, vector<8x16xf32>,
    %c0_92 = arith.constant 0 : index
    %c0_93 = arith.constant 0 : index
    %193 = vector.load %arg9[%c0_92, %c0_93] : memref<8x48xf32, #tpu.memory_space<vmem>>, vector<8x16xf32>
    tpu.vector_store %arg9[%c0_92, %c0_93], %191 {strides = array<i32>} : memref<8x48xf32, #tpu.memory_space<vmem>>, vector<8x16xf32>,
    %c0_94 = arith.constant 0 : index
    %c16_95 = arith.constant 16 : index
    %194 = vector.load %arg9[%c0_94, %c16_95] : memref<8x48xf32, #tpu.memory_space<vmem>>, vector<8x32xf32>
    tpu.vector_store %arg9[%c0_94, %c16_95], %177 {strides = array<i32>} : memref<8x48xf32, #tpu.memory_space<vmem>>, vector<8x32xf32>,
    %c0_96 = arith.constant 0 : index
    %c0_97 = arith.constant 0 : index
    %195 = vector.load %arg9[%c0_96, %c0_97] : memref<8x48xf32, #tpu.memory_space<vmem>>, vector<8x48xf32>
    %cst_98 = arith.constant dense<0.000000e+00> : vector<8x96xf32>
    %196 = tpu.matmul %195, %0, %cst_98 {dimension_numbers = #tpu.dot_dimension_numbers<[1], [0], [0], [1], [0, 0, 1, 1], [], []>} : vector<8x48xf32>, vector<48x96xf32>, vector<8x96xf32> -> vector<8x96xf32>
    %197 = vector.broadcast %2 : vector<1x96xf32> to vector<8x96xf32>
    %198 = arith.addf %196, %197 : vector<8x96xf32>
    %cst_99 = arith.constant dense<0.000000e+00> : vector<8x32xf32>
    %199 = tpu.matmul %177, %1, %cst_99 {dimension_numbers = #tpu.dot_dimension_numbers<[1], [0], [0], [1], [0, 0, 1, 1], [], []>} : vector<8x32xf32>, vector<32x32xf32>, vector<8x32xf32> -> vector<8x32xf32>
    %200 = vector.broadcast %3 : vector<1x32xf32> to vector<8x32xf32>
    %201 = arith.addf %199, %200 : vector<8x32xf32>
    %202 = vector.extract_strided_slice %198 {offsets = [0, 0], sizes = [8, 32], strides = [1, 1]} : vector<8x96xf32> to vector<8x32xf32>
    %203 = arith.negf %202 : vector<8x32xf32>
    %204 = math.exp %203 : vector<8x32xf32>
    %cst_100 = arith.constant 1.000000e+00 : f32
    %205 = vector.broadcast %cst_100 : f32 to vector<8x32xf32>
    %206 = arith.addf %205, %204 : vector<8x32xf32>
    %207 = arith.divf %205, %206 : vector<8x32xf32>
    %208 = vector.extract_strided_slice %198 {offsets = [0, 32], sizes = [8, 32], strides = [1, 1]} : vector<8x96xf32> to vector<8x32xf32>
    %209 = arith.negf %208 : vector<8x32xf32>
    %210 = math.exp %209 : vector<8x32xf32>
    %cst_101 = arith.constant 1.000000e+00 : f32
    %211 = vector.broadcast %cst_101 : f32 to vector<8x32xf32>
    %212 = arith.addf %211, %210 : vector<8x32xf32>
    %213 = arith.divf %211, %212 : vector<8x32xf32>
    %214 = vector.extract_strided_slice %198 {offsets = [0, 64], sizes = [8, 32], strides = [1, 1]} : vector<8x96xf32> to vector<8x32xf32>
    %215 = arith.mulf %207, %201 : vector<8x32xf32>
    %216 = arith.addf %214, %215 : vector<8x32xf32>
    %217 = math.tanh %216 : vector<8x32xf32>
    %cst_102 = arith.constant 1.000000e+00 : f32
    %218 = vector.broadcast %cst_102 : f32 to vector<8x32xf32>
    %219 = arith.subf %218, %213 : vector<8x32xf32>
    %220 = arith.mulf %219, %217 : vector<8x32xf32>
    %221 = arith.mulf %213, %177 : vector<8x32xf32>
    %222 = arith.addf %220, %221 : vector<8x32xf32>
    %cst_103 = arith.constant dense<0.000000e+00> : vector<8x24xf32>
    %223 = tpu.matmul %222, %4, %cst_103 {dimension_numbers = #tpu.dot_dimension_numbers<[1], [0], [0], [1], [0, 0, 1, 1], [], []>} : vector<8x32xf32>, vector<32x24xf32>, vector<8x24xf32> -> vector<8x24xf32>
    %224 = vector.broadcast %5 : vector<1x24xf32> to vector<8x24xf32>
    %225 = arith.addf %223, %224 : vector<8x24xf32>
    %226 = vector.extract_strided_slice %225 {offsets = [0, 16], sizes = [8, 8], strides = [1, 1]} : vector<8x24xf32> to vector<8x8xf32>
    %227 = math.tanh %226 : vector<8x8xf32>
    %c0_104 = arith.constant 0 : index
    %c240 = arith.constant 240 : index
    %228 = vector.load %arg8[%c0_104, %c240] : memref<8x448xf32, #tpu.memory_space<vmem>>, vector<8x32xf32>
    tpu.vector_store %arg8[%c0_104, %c240], %222 {strides = array<i32>} : memref<8x448xf32, #tpu.memory_space<vmem>>, vector<8x32xf32>,
    %c0_105 = arith.constant 0 : index
    %c272 = arith.constant 272 : index
    %229 = vector.load %arg8[%c0_105, %c272] : memref<8x448xf32, #tpu.memory_space<vmem>>, vector<8x8xf32>
    tpu.vector_store %arg8[%c0_105, %c272], %227 {strides = array<i32>} : memref<8x448xf32, #tpu.memory_space<vmem>>, vector<8x8xf32>,
    %230 = vector.extract_strided_slice %225 {offsets = [0, 0], sizes = [8, 16], strides = [1, 1]} : vector<8x24xf32> to vector<8x16xf32>
    %cst_106 = arith.constant 0.000000e+00 : f32
    %231 = vector.broadcast %cst_106 : f32 to vector<8x16xf32>
    %232 = arith.maximumf %230, %231 : vector<8x16xf32>
    %c0_107 = arith.constant 0 : index
    %c80 = arith.constant 80 : index
    %233 = vector.load %arg0[%c0_107, %c80] : memref<8x128xf32, #tpu.memory_space<vmem>>, vector<8x16xf32>
    %234 = arith.addf %233, %232 : vector<8x16xf32>
    %cst_108 = arith.constant 5.000000e-01 : f32
    %235 = vector.broadcast %cst_108 : f32 to vector<8x16xf32>
    %236 = arith.mulf %234, %235 : vector<8x16xf32>
    %c0_109 = arith.constant 0 : index
    %c280 = arith.constant 280 : index
    %237 = vector.load %arg8[%c0_109, %c280] : memref<8x448xf32, #tpu.memory_space<vmem>>, vector<8x16xf32>
    tpu.vector_store %arg8[%c0_109, %c280], %236 {strides = array<i32>} : memref<8x448xf32, #tpu.memory_space<vmem>>, vector<8x16xf32>,
    %c0_110 = arith.constant 0 : index
    %c0_111 = arith.constant 0 : index
    %238 = vector.load %arg9[%c0_110, %c0_111] : memref<8x48xf32, #tpu.memory_space<vmem>>, vector<8x16xf32>
    tpu.vector_store %arg9[%c0_110, %c0_111], %236 {strides = array<i32>} : memref<8x48xf32, #tpu.memory_space<vmem>>, vector<8x16xf32>,
    %c0_112 = arith.constant 0 : index
    %c16_113 = arith.constant 16 : index
    %239 = vector.load %arg9[%c0_112, %c16_113] : memref<8x48xf32, #tpu.memory_space<vmem>>, vector<8x32xf32>
    tpu.vector_store %arg9[%c0_112, %c16_113], %222 {strides = array<i32>} : memref<8x48xf32, #tpu.memory_space<vmem>>, vector<8x32xf32>,
    %c0_114 = arith.constant 0 : index
    %c0_115 = arith.constant 0 : index
    %240 = vector.load %arg9[%c0_114, %c0_115] : memref<8x48xf32, #tpu.memory_space<vmem>>, vector<8x48xf32>
    %cst_116 = arith.constant dense<0.000000e+00> : vector<8x96xf32>
    %241 = tpu.matmul %240, %0, %cst_116 {dimension_numbers = #tpu.dot_dimension_numbers<[1], [0], [0], [1], [0, 0, 1, 1], [], []>} : vector<8x48xf32>, vector<48x96xf32>, vector<8x96xf32> -> vector<8x96xf32>
    %242 = vector.broadcast %2 : vector<1x96xf32> to vector<8x96xf32>
    %243 = arith.addf %241, %242 : vector<8x96xf32>
    %cst_117 = arith.constant dense<0.000000e+00> : vector<8x32xf32>
    %244 = tpu.matmul %222, %1, %cst_117 {dimension_numbers = #tpu.dot_dimension_numbers<[1], [0], [0], [1], [0, 0, 1, 1], [], []>} : vector<8x32xf32>, vector<32x32xf32>, vector<8x32xf32> -> vector<8x32xf32>
    %245 = vector.broadcast %3 : vector<1x32xf32> to vector<8x32xf32>
    %246 = arith.addf %244, %245 : vector<8x32xf32>
    %247 = vector.extract_strided_slice %243 {offsets = [0, 0], sizes = [8, 32], strides = [1, 1]} : vector<8x96xf32> to vector<8x32xf32>
    %248 = arith.negf %247 : vector<8x32xf32>
    %249 = math.exp %248 : vector<8x32xf32>
    %cst_118 = arith.constant 1.000000e+00 : f32
    %250 = vector.broadcast %cst_118 : f32 to vector<8x32xf32>
    %251 = arith.addf %250, %249 : vector<8x32xf32>
    %252 = arith.divf %250, %251 : vector<8x32xf32>
    %253 = vector.extract_strided_slice %243 {offsets = [0, 32], sizes = [8, 32], strides = [1, 1]} : vector<8x96xf32> to vector<8x32xf32>
    %254 = arith.negf %253 : vector<8x32xf32>
    %255 = math.exp %254 : vector<8x32xf32>
    %cst_119 = arith.constant 1.000000e+00 : f32
    %256 = vector.broadcast %cst_119 : f32 to vector<8x32xf32>
    %257 = arith.addf %256, %255 : vector<8x32xf32>
    %258 = arith.divf %256, %257 : vector<8x32xf32>
    %259 = vector.extract_strided_slice %243 {offsets = [0, 64], sizes = [8, 32], strides = [1, 1]} : vector<8x96xf32> to vector<8x32xf32>
    %260 = arith.mulf %252, %246 : vector<8x32xf32>
    %261 = arith.addf %259, %260 : vector<8x32xf32>
    %262 = math.tanh %261 : vector<8x32xf32>
    %cst_120 = arith.constant 1.000000e+00 : f32
    %263 = vector.broadcast %cst_120 : f32 to vector<8x32xf32>
    %264 = arith.subf %263, %258 : vector<8x32xf32>
    %265 = arith.mulf %264, %262 : vector<8x32xf32>
    %266 = arith.mulf %258, %222 : vector<8x32xf32>
    %267 = arith.addf %265, %266 : vector<8x32xf32>
    %cst_121 = arith.constant dense<0.000000e+00> : vector<8x24xf32>
    %268 = tpu.matmul %267, %4, %cst_121 {dimension_numbers = #tpu.dot_dimension_numbers<[1], [0], [0], [1], [0, 0, 1, 1], [], []>} : vector<8x32xf32>, vector<32x24xf32>, vector<8x24xf32> -> vector<8x24xf32>
    %269 = vector.broadcast %5 : vector<1x24xf32> to vector<8x24xf32>
    %270 = arith.addf %268, %269 : vector<8x24xf32>
    %271 = vector.extract_strided_slice %270 {offsets = [0, 16], sizes = [8, 8], strides = [1, 1]} : vector<8x24xf32> to vector<8x8xf32>
    %272 = math.tanh %271 : vector<8x8xf32>
    %c0_122 = arith.constant 0 : index
    %c296 = arith.constant 296 : index
    %273 = vector.load %arg8[%c0_122, %c296] : memref<8x448xf32, #tpu.memory_space<vmem>>, vector<8x32xf32>
    tpu.vector_store %arg8[%c0_122, %c296], %267 {strides = array<i32>} : memref<8x448xf32, #tpu.memory_space<vmem>>, vector<8x32xf32>,
    %c0_123 = arith.constant 0 : index
    %c328 = arith.constant 328 : index
    %274 = vector.load %arg8[%c0_123, %c328] : memref<8x448xf32, #tpu.memory_space<vmem>>, vector<8x8xf32>
    tpu.vector_store %arg8[%c0_123, %c328], %272 {strides = array<i32>} : memref<8x448xf32, #tpu.memory_space<vmem>>, vector<8x8xf32>,
    %275 = vector.extract_strided_slice %270 {offsets = [0, 0], sizes = [8, 16], strides = [1, 1]} : vector<8x24xf32> to vector<8x16xf32>
    %cst_124 = arith.constant 0.000000e+00 : f32
    %276 = vector.broadcast %cst_124 : f32 to vector<8x16xf32>
    %277 = arith.maximumf %275, %276 : vector<8x16xf32>
    %c0_125 = arith.constant 0 : index
    %c96 = arith.constant 96 : index
    %278 = vector.load %arg0[%c0_125, %c96] : memref<8x128xf32, #tpu.memory_space<vmem>>, vector<8x16xf32>
    %279 = arith.addf %278, %277 : vector<8x16xf32>
    %cst_126 = arith.constant 5.000000e-01 : f32
    %280 = vector.broadcast %cst_126 : f32 to vector<8x16xf32>
    %281 = arith.mulf %279, %280 : vector<8x16xf32>
    %c0_127 = arith.constant 0 : index
    %c336 = arith.constant 336 : index
    %282 = vector.load %arg8[%c0_127, %c336] : memref<8x448xf32, #tpu.memory_space<vmem>>, vector<8x16xf32>
    tpu.vector_store %arg8[%c0_127, %c336], %281 {strides = array<i32>} : memref<8x448xf32, #tpu.memory_space<vmem>>, vector<8x16xf32>,
    %c0_128 = arith.constant 0 : index
    %c0_129 = arith.constant 0 : index
    %283 = vector.load %arg9[%c0_128, %c0_129] : memref<8x48xf32, #tpu.memory_space<vmem>>, vector<8x16xf32>
    tpu.vector_store %arg9[%c0_128, %c0_129], %281 {strides = array<i32>} : memref<8x48xf32, #tpu.memory_space<vmem>>, vector<8x16xf32>,
    %c0_130 = arith.constant 0 : index
    %c16_131 = arith.constant 16 : index
    %284 = vector.load %arg9[%c0_130, %c16_131] : memref<8x48xf32, #tpu.memory_space<vmem>>, vector<8x32xf32>
    tpu.vector_store %arg9[%c0_130, %c16_131], %267 {strides = array<i32>} : memref<8x48xf32, #tpu.memory_space<vmem>>, vector<8x32xf32>,
    %c0_132 = arith.constant 0 : index
    %c0_133 = arith.constant 0 : index
    %285 = vector.load %arg9[%c0_132, %c0_133] : memref<8x48xf32, #tpu.memory_space<vmem>>, vector<8x48xf32>
    %cst_134 = arith.constant dense<0.000000e+00> : vector<8x96xf32>
    %286 = tpu.matmul %285, %0, %cst_134 {dimension_numbers = #tpu.dot_dimension_numbers<[1], [0], [0], [1], [0, 0, 1, 1], [], []>} : vector<8x48xf32>, vector<48x96xf32>, vector<8x96xf32> -> vector<8x96xf32>
    %287 = vector.broadcast %2 : vector<1x96xf32> to vector<8x96xf32>
    %288 = arith.addf %286, %287 : vector<8x96xf32>
    %cst_135 = arith.constant dense<0.000000e+00> : vector<8x32xf32>
    %289 = tpu.matmul %267, %1, %cst_135 {dimension_numbers = #tpu.dot_dimension_numbers<[1], [0], [0], [1], [0, 0, 1, 1], [], []>} : vector<8x32xf32>, vector<32x32xf32>, vector<8x32xf32> -> vector<8x32xf32>
    %290 = vector.broadcast %3 : vector<1x32xf32> to vector<8x32xf32>
    %291 = arith.addf %289, %290 : vector<8x32xf32>
    %292 = vector.extract_strided_slice %288 {offsets = [0, 0], sizes = [8, 32], strides = [1, 1]} : vector<8x96xf32> to vector<8x32xf32>
    %293 = arith.negf %292 : vector<8x32xf32>
    %294 = math.exp %293 : vector<8x32xf32>
    %cst_136 = arith.constant 1.000000e+00 : f32
    %295 = vector.broadcast %cst_136 : f32 to vector<8x32xf32>
    %296 = arith.addf %295, %294 : vector<8x32xf32>
    %297 = arith.divf %295, %296 : vector<8x32xf32>
    %298 = vector.extract_strided_slice %288 {offsets = [0, 32], sizes = [8, 32], strides = [1, 1]} : vector<8x96xf32> to vector<8x32xf32>
    %299 = arith.negf %298 : vector<8x32xf32>
    %300 = math.exp %299 : vector<8x32xf32>
    %cst_137 = arith.constant 1.000000e+00 : f32
    %301 = vector.broadcast %cst_137 : f32 to vector<8x32xf32>
    %302 = arith.addf %301, %300 : vector<8x32xf32>
    %303 = arith.divf %301, %302 : vector<8x32xf32>
    %304 = vector.extract_strided_slice %288 {offsets = [0, 64], sizes = [8, 32], strides = [1, 1]} : vector<8x96xf32> to vector<8x32xf32>
    %305 = arith.mulf %297, %291 : vector<8x32xf32>
    %306 = arith.addf %304, %305 : vector<8x32xf32>
    %307 = math.tanh %306 : vector<8x32xf32>
    %cst_138 = arith.constant 1.000000e+00 : f32
    %308 = vector.broadcast %cst_138 : f32 to vector<8x32xf32>
    %309 = arith.subf %308, %303 : vector<8x32xf32>
    %310 = arith.mulf %309, %307 : vector<8x32xf32>
    %311 = arith.mulf %303, %267 : vector<8x32xf32>
    %312 = arith.addf %310, %311 : vector<8x32xf32>
    %cst_139 = arith.constant dense<0.000000e+00> : vector<8x24xf32>
    %313 = tpu.matmul %312, %4, %cst_139 {dimension_numbers = #tpu.dot_dimension_numbers<[1], [0], [0], [1], [0, 0, 1, 1], [], []>} : vector<8x32xf32>, vector<32x24xf32>, vector<8x24xf32> -> vector<8x24xf32>
    %314 = vector.broadcast %5 : vector<1x24xf32> to vector<8x24xf32>
    %315 = arith.addf %313, %314 : vector<8x24xf32>
    %316 = vector.extract_strided_slice %315 {offsets = [0, 16], sizes = [8, 8], strides = [1, 1]} : vector<8x24xf32> to vector<8x8xf32>
    %317 = math.tanh %316 : vector<8x8xf32>
    %c0_140 = arith.constant 0 : index
    %c352 = arith.constant 352 : index
    %318 = vector.load %arg8[%c0_140, %c352] : memref<8x448xf32, #tpu.memory_space<vmem>>, vector<8x32xf32>
    tpu.vector_store %arg8[%c0_140, %c352], %312 {strides = array<i32>} : memref<8x448xf32, #tpu.memory_space<vmem>>, vector<8x32xf32>,
    %c0_141 = arith.constant 0 : index
    %c384 = arith.constant 384 : index
    %319 = vector.load %arg8[%c0_141, %c384] : memref<8x448xf32, #tpu.memory_space<vmem>>, vector<8x8xf32>
    tpu.vector_store %arg8[%c0_141, %c384], %317 {strides = array<i32>} : memref<8x448xf32, #tpu.memory_space<vmem>>, vector<8x8xf32>,
    %320 = vector.extract_strided_slice %315 {offsets = [0, 0], sizes = [8, 16], strides = [1, 1]} : vector<8x24xf32> to vector<8x16xf32>
    %cst_142 = arith.constant 0.000000e+00 : f32
    %321 = vector.broadcast %cst_142 : f32 to vector<8x16xf32>
    %322 = arith.maximumf %320, %321 : vector<8x16xf32>
    %c0_143 = arith.constant 0 : index
    %c112_144 = arith.constant 112 : index
    %323 = vector.load %arg0[%c0_143, %c112_144] : memref<8x128xf32, #tpu.memory_space<vmem>>, vector<8x16xf32>
    %324 = arith.addf %323, %322 : vector<8x16xf32>
    %cst_145 = arith.constant 5.000000e-01 : f32
    %325 = vector.broadcast %cst_145 : f32 to vector<8x16xf32>
    %326 = arith.mulf %324, %325 : vector<8x16xf32>
    %c0_146 = arith.constant 0 : index
    %c392 = arith.constant 392 : index
    %327 = vector.load %arg8[%c0_146, %c392] : memref<8x448xf32, #tpu.memory_space<vmem>>, vector<8x16xf32>
    tpu.vector_store %arg8[%c0_146, %c392], %326 {strides = array<i32>} : memref<8x448xf32, #tpu.memory_space<vmem>>, vector<8x16xf32>,
    %c0_147 = arith.constant 0 : index
    %c0_148 = arith.constant 0 : index
    %328 = vector.load %arg9[%c0_147, %c0_148] : memref<8x48xf32, #tpu.memory_space<vmem>>, vector<8x16xf32>
    tpu.vector_store %arg9[%c0_147, %c0_148], %326 {strides = array<i32>} : memref<8x48xf32, #tpu.memory_space<vmem>>, vector<8x16xf32>,
    %c0_149 = arith.constant 0 : index
    %c16_150 = arith.constant 16 : index
    %329 = vector.load %arg9[%c0_149, %c16_150] : memref<8x48xf32, #tpu.memory_space<vmem>>, vector<8x32xf32>
    tpu.vector_store %arg9[%c0_149, %c16_150], %312 {strides = array<i32>} : memref<8x48xf32, #tpu.memory_space<vmem>>, vector<8x32xf32>,
    %c0_151 = arith.constant 0 : index
    %c0_152 = arith.constant 0 : index
    %330 = vector.load %arg9[%c0_151, %c0_152] : memref<8x48xf32, #tpu.memory_space<vmem>>, vector<8x48xf32>
    %cst_153 = arith.constant dense<0.000000e+00> : vector<8x96xf32>
    %331 = tpu.matmul %330, %0, %cst_153 {dimension_numbers = #tpu.dot_dimension_numbers<[1], [0], [0], [1], [0, 0, 1, 1], [], []>} : vector<8x48xf32>, vector<48x96xf32>, vector<8x96xf32> -> vector<8x96xf32>
    %332 = vector.broadcast %2 : vector<1x96xf32> to vector<8x96xf32>
    %333 = arith.addf %331, %332 : vector<8x96xf32>
    %cst_154 = arith.constant dense<0.000000e+00> : vector<8x32xf32>
    %334 = tpu.matmul %312, %1, %cst_154 {dimension_numbers = #tpu.dot_dimension_numbers<[1], [0], [0], [1], [0, 0, 1, 1], [], []>} : vector<8x32xf32>, vector<32x32xf32>, vector<8x32xf32> -> vector<8x32xf32>
    %335 = vector.broadcast %3 : vector<1x32xf32> to vector<8x32xf32>
    %336 = arith.addf %334, %335 : vector<8x32xf32>
    %337 = vector.extract_strided_slice %333 {offsets = [0, 0], sizes = [8, 32], strides = [1, 1]} : vector<8x96xf32> to vector<8x32xf32>
    %338 = arith.negf %337 : vector<8x32xf32>
    %339 = math.exp %338 : vector<8x32xf32>
    %cst_155 = arith.constant 1.000000e+00 : f32
    %340 = vector.broadcast %cst_155 : f32 to vector<8x32xf32>
    %341 = arith.addf %340, %339 : vector<8x32xf32>
    %342 = arith.divf %340, %341 : vector<8x32xf32>
    %343 = vector.extract_strided_slice %333 {offsets = [0, 32], sizes = [8, 32], strides = [1, 1]} : vector<8x96xf32> to vector<8x32xf32>
    %344 = arith.negf %343 : vector<8x32xf32>
    %345 = math.exp %344 : vector<8x32xf32>
    %cst_156 = arith.constant 1.000000e+00 : f32
    %346 = vector.broadcast %cst_156 : f32 to vector<8x32xf32>
    %347 = arith.addf %346, %345 : vector<8x32xf32>
    %348 = arith.divf %346, %347 : vector<8x32xf32>
    %349 = vector.extract_strided_slice %333 {offsets = [0, 64], sizes = [8, 32], strides = [1, 1]} : vector<8x96xf32> to vector<8x32xf32>
    %350 = arith.mulf %342, %336 : vector<8x32xf32>
    %351 = arith.addf %349, %350 : vector<8x32xf32>
    %352 = math.tanh %351 : vector<8x32xf32>
    %cst_157 = arith.constant 1.000000e+00 : f32
    %353 = vector.broadcast %cst_157 : f32 to vector<8x32xf32>
    %354 = arith.subf %353, %348 : vector<8x32xf32>
    %355 = arith.mulf %354, %352 : vector<8x32xf32>
    %356 = arith.mulf %348, %312 : vector<8x32xf32>
    %357 = arith.addf %355, %356 : vector<8x32xf32>
    %cst_158 = arith.constant dense<0.000000e+00> : vector<8x24xf32>
    %358 = tpu.matmul %357, %4, %cst_158 {dimension_numbers = #tpu.dot_dimension_numbers<[1], [0], [0], [1], [0, 0, 1, 1], [], []>} : vector<8x32xf32>, vector<32x24xf32>, vector<8x24xf32> -> vector<8x24xf32>
    %359 = vector.broadcast %5 : vector<1x24xf32> to vector<8x24xf32>
    %360 = arith.addf %358, %359 : vector<8x24xf32>
    %361 = vector.extract_strided_slice %360 {offsets = [0, 16], sizes = [8, 8], strides = [1, 1]} : vector<8x24xf32> to vector<8x8xf32>
    %362 = math.tanh %361 : vector<8x8xf32>
    %c0_159 = arith.constant 0 : index
    %c408 = arith.constant 408 : index
    %363 = vector.load %arg8[%c0_159, %c408] : memref<8x448xf32, #tpu.memory_space<vmem>>, vector<8x32xf32>
    tpu.vector_store %arg8[%c0_159, %c408], %357 {strides = array<i32>} : memref<8x448xf32, #tpu.memory_space<vmem>>, vector<8x32xf32>,
    %c0_160 = arith.constant 0 : index
    %c440 = arith.constant 440 : index
    %364 = vector.load %arg8[%c0_160, %c440] : memref<8x448xf32, #tpu.memory_space<vmem>>, vector<8x8xf32>
    tpu.vector_store %arg8[%c0_160, %c440], %362 {strides = array<i32>} : memref<8x448xf32, #tpu.memory_space<vmem>>, vector<8x8xf32>,
    return
  }
}

</mosaic_0001>

<llo_original>
// kernel: decoder_gru_forward.1
$region0: #{decoder_gru_forward.1}
  #allocation0 [shape = 'u32[]', space=smem, size = 0x4, offset = 0x4, fixed_abs, tag = 'smem constant byte address 0x4 - core index']
  #allocation1 [shape = 'u32[72,128]{1,0:T(1,128)}', space=vmem, size = 0x9000, scoped, tag = 'internal scratch']
  #allocation2 [shape = 'f32[8,48]{1,0:T(8,128)}', space=vmem, size = 0x1000, scoped, tag = 'scratch operand']
  %s0 = inlined_call_operand.vmem [shape: f32[8,128], index: 0, kind: input, shape index: {}]
  %s1 = inlined_call_operand.vmem [shape: f32[8,32], index: 1, kind: input, shape index: {}]
  %s2 = inlined_call_operand.vmem [shape: f32[48,96], index: 2, kind: input, shape index: {}]
  %s3 = inlined_call_operand.vmem [shape: f32[32,32], index: 3, kind: input, shape index: {}]
  %s4 = inlined_call_operand.vmem [shape: f32[1,96], index: 4, kind: input, shape index: {}]
  %s5 = inlined_call_operand.vmem [shape: f32[1,32], index: 5, kind: input, shape index: {}]
  %s6 = inlined_call_operand.vmem [shape: f32[32,24], index: 6, kind: input, shape index: {}]
  %s7 = inlined_call_operand.vmem [shape: f32[1,24], index: 7, kind: input, shape index: {}]
  %s8 = inlined_call_operand.vmem [shape: f32[8,448], index: 8, kind: output, shape index: {}]
  %s9 = sld [smem:[#allocation0]]
  $region42: #{decoder_gru_forward.1} parent=0
    _
  %s11 = ssub.s32 1, %s9
  %s12 = scalar_select 0, %s11, %s9
  // Predicated region
  $region2: #{decoder_gru_forward.1} parent=0 // pred_check
    _
  $region3: #{decoder_gru_forward.1} parent=0 // pred_check_branch
    %14 = sbr.rel (0) target = $region5
  $region4: #{decoder_gru_forward.1} parent=0 // pred_region
    _
  $region5: #{decoder_gru_forward.1} parent=0 // pred_fallthru
    _
  // Predicated region
  $region6: #{decoder_gru_forward.1} parent=0 // pred_check
    _
  $region7: #{decoder_gru_forward.1} parent=0 // pred_check_branch
    %16 = sbr.rel (0) target = $region9
  $region8: #{decoder_gru_forward.1} parent=0 // pred_region
    _
  $region9: #{decoder_gru_forward.1} parent=0 // pred_fallthru
    _
  // Predicated region
  $region10: #{decoder_gru_forward.1} parent=0 // pred_check
    _
  $region11: #{decoder_gru_forward.1} parent=0 // pred_check_branch
    %18 = sbr.rel (0) target = $region13
  $region12: #{decoder_gru_forward.1} parent=0 // pred_region
    _
  $region13: #{decoder_gru_forward.1} parent=0 // pred_fallthru
    _
  // Predicated region
  $region14: #{decoder_gru_forward.1} parent=0 // pred_check
    _
  $region15: #{decoder_gru_forward.1} parent=0 // pred_check_branch
    %20 = sbr.rel (0) target = $region17
  $region16: #{decoder_gru_forward.1} parent=0 // pred_region
    _
  $region17: #{decoder_gru_forward.1} parent=0 // pred_fallthru
    _
  // Predicated region
  $region18: #{decoder_gru_forward.1} parent=0 // pred_check
    _
  $region19: #{decoder_gru_forward.1} parent=0 // pred_check_branch
    %22 = sbr.rel (0) target = $region21
  $region20: #{decoder_gru_forward.1} parent=0 // pred_region
    _
  $region21: #{decoder_gru_forward.1} parent=0 // pred_fallthru
    _
  // Predicated region
  $region22: #{decoder_gru_forward.1} parent=0 // pred_check
    _
  $region23: #{decoder_gru_forward.1} parent=0 // pred_check_branch
    %24 = sbr.rel (0) target = $region25
  $region24: #{decoder_gru_forward.1} parent=0 // pred_region
    _
  $region25: #{decoder_gru_forward.1} parent=0 // pred_fallthru
    _
  // Predicated region
  $region26: #{decoder_gru_forward.1} parent=0 // pred_check
    _
  $region27: #{decoder_gru_forward.1} parent=0 // pred_check_branch
    %26 = sbr.rel (0) target = $region29
  $region28: #{decoder_gru_forward.1} parent=0 // pred_region
    _
  $region29: #{decoder_gru_forward.1} parent=0 // pred_fallthru
    _
  // Predicated region
  $region30: #{decoder_gru_forward.1} parent=0 // pred_check
    _
  $region31: #{decoder_gru_forward.1} parent=0 // pred_check_branch
    %28 = sbr.rel (0) target = $region33
  $region32: #{decoder_gru_forward.1} parent=0 // pred_region
    _
  $region33: #{decoder_gru_forward.1} parent=0 // pred_fallthru
    _
  %v29 = vld [vmem:[%s2] sm:$0xff]
  %v30 = vld [vmem:[%s2 + $0x8] sm:$0xff]
  %v31 = vld [vmem:[%s2 + $0x10] sm:$0xff]
  %v32 = vld [vmem:[%s2 + $0x18] sm:$0xff]
  %v33 = vld [vmem:[%s2 + $0x20] sm:$0xff]
  %v34 = vld [vmem:[%s2 + $0x28] sm:$0xff]
  %v35 = vld [vmem:[%s3] sm:$0xff]
  %v36 = vld [vmem:[%s3 + $0x8] sm:$0xff]
  %v37 = vld [vmem:[%s3 + $0x10] sm:$0xff]
  %v38 = vld [vmem:[%s3 + $0x18] sm:$0xff]
  %v39 = vld [vmem:[%s4] sm:$0x1]
  %v40 = vld [vmem:[%s5] sm:$0x1]
  %v41 = vld [vmem:[%s6] sm:$0xff]
  %v42 = vld [vmem:[%s6 + $0x8] sm:$0xff]
  %v43 = vld [vmem:[%s6 + $0x10] sm:$0xff]
  %v44 = vld [vmem:[%s6 + $0x18] sm:$0xff]
  %v45 = vld [vmem:[%s7] sm:$0x1]
  %v46 = vld [vmem:[%s1] sm:$0xff]
  %v47 = vld [vmem:[%s0] sm:$0xff]
  %v48 = vadd.f32 %v47, 0.0
  %v49 = vmul.f32 %v48, 0.5
  %vm50 = vcmask 130048
  %51 = vst.msk [vmem:[%s8] sm:$0xff] %vm50, %v49
  %52 = vst.msk [vmem:[#allocation2] sm:$0xff] %vm50, %v49
  %54 = vrot.lane.b32.xlu0 %v46, 16
  %v55 = vpop.permute.xlu0 %54
  %vm57 = vcmask 392320
  %58 = vst.msk [vmem:[#allocation2] sm:$0xff] %vm57, %v55
  %v59 = vld [vmem:[#allocation2] sm:$0xff]
  %v61 = vperm.slane %v39, 0
  %vm63 = vcmask 392192
  %v65 = vsel %vm63, %v59, 0
  %67 = vmatpush.msra.mxu0 0.0
  %68 = vmatpush.msra.mxu0 0.0
  %69 = vmatpush.msra.mxu0 0.0
  %70 = vmatpush.msra.mxu0 0.0
  %71 = vmatpush.msra.mxu0 0.0
  %72 = vmatpush.msra.mxu0 0.0
  %73 = vmatpush.msra.mxu0 0.0
  %74 = vmatpush.msra.mxu0 0.0
  %75 = vmatpush.msra.mxu0 0.0
  %76 = vmatpush.msra.mxu0 0.0
  %77 = vmatpush.msra.mxu0 %v34
  %78 = vmatpush.msra.mxu0 %v33
  %79 = vmatpush.msra.mxu0 %v32
  %80 = vmatpush.msra.mxu0 %v31
  %81 = vmatpush.msra.mxu0 %v30
  %82 = vmatpush.msra.mxu0 %v29
  %83 = vmatmul.f32.gmra.mxu0 %v65
  %v84 = vpop.f32.mrf.mxu0
  %v85 = vadd.f32 %v61, %v84
  %86 = vdwg.mxu0
  %v88 = vperm.slane %v40, 0
  %vm90 = vcmask 261120
  %v91 = vsel %vm90, %v46, 0
  %93 = vmatpush.msra.mxu0 0.0
  %94 = vmatpush.msra.mxu0 0.0
  %95 = vmatpush.msra.mxu0 0.0
  %96 = vmatpush.msra.mxu0 0.0
  %97 = vmatpush.msra.mxu0 0.0
  %98 = vmatpush.msra.mxu0 0.0
  %99 = vmatpush.msra.mxu0 0.0
  %100 = vmatpush.msra.mxu0 0.0
  %101 = vmatpush.msra.mxu0 0.0
  %102 = vmatpush.msra.mxu0 0.0
  %103 = vmatpush.msra.mxu0 0.0
  %104 = vmatpush.msra.mxu0 0.0
  %105 = vmatpush.msra.mxu0 %v38
  %106 = vmatpush.msra.mxu0 %v37
  %107 = vmatpush.msra.mxu0 %v36
  %108 = vmatpush.msra.mxu0 %v35
  %109 = vmatmul.f32.gmra.mxu0 %v91
  %v110 = vpop.f32.mrf.mxu0
  %v111 = vadd.f32 %v88, %v110
  %112 = vdwg.mxu0
  %v113 = vxor.u32 %v85, 2147483648
  %v114 = vmul.f32 %v113, 1.442695
  %v115 = vpow.pop %v114
  %v116 = vadd.f32 %v115, 1.0
  %v117 = vrcp.pop %v116
  %v118 = vmul.f32 %v116, %v117
  %v119 = vsub.f32 1.0, %v118
  %v120 = vmul.f32 %v117, %v119
  %v121 = vadd.f32 %v117, %v120
  %vm122 = vweird.f32 %v116
  %vm123 = vweird.f32 %v117
  %vm124 = vmor %vm122, %vm123
  %v125 = vsel %vm124, %v117, %v121
  %v126 = vand.u32 2147483647, %v116
  %vm127 = vcmp.eq.f32.partialorder %v126, 8.507059e+37
  %v128 = vand.u32 %v116, 2147483648
  %v129 = vor.u32 1.1754944e-38, %v128
  %v130 = vsel %vm127, %v129, %v125
  %v131 = vmul.f32 1.0, %v130
  %v132 = vmul.f32 %v131, %v111
  %134 = vrot.lane.b32.xlu0 %v132, 64
  %v135 = vpop.permute.xlu0 %134
  %v137 = vadd.f32 %v85, %v135
  %v138 = vtanh.pop %v137
  %v139 = vsub.f32 1.0, %v131
  %141 = vrot.lane.b32.xlu0 %v138, 96
  %v142 = vpop.permute.xlu0 %141
  %v144 = vmul.f32 %v139, %v142
  %145 = vrot.lane.b32.xlu0 %v46, 32
  %v146 = vpop.permute.xlu0 %145
  %v148 = vmul.f32 %v131, %v146
  %v149 = vadd.f32 %v144, %v148
  %v151 = vperm.slane %v45, 0
  %154 = vrot.lane.b32.xlu0 %v149, 96
  %v155 = vpop.permute.xlu0 %154
  %v156 = vsel %vm90, %v155, 0
  %158 = vmatpush.msra.mxu0 0.0
  %159 = vmatpush.msra.mxu0 0.0
  %160 = vmatpush.msra.mxu0 0.0
  %161 = vmatpush.msra.mxu0 0.0
  %162 = vmatpush.msra.mxu0 0.0
  %163 = vmatpush.msra.mxu0 0.0
  %164 = vmatpush.msra.mxu0 0.0
  %165 = vmatpush.msra.mxu0 0.0
  %166 = vmatpush.msra.mxu0 0.0
  %167 = vmatpush.msra.mxu0 0.0
  %168 = vmatpush.msra.mxu0 0.0
  %169 = vmatpush.msra.mxu0 0.0
  %170 = vmatpush.msra.mxu0 %v44
  %171 = vmatpush.msra.mxu0 %v43
  %172 = vmatpush.msra.mxu0 %v42
  %173 = vmatpush.msra.mxu0 %v41
  %174 = vmatmul.f32.gmra.mxu0 %v156
  %v175 = vpop.f32.mrf.mxu0
  %v176 = vadd.f32 %v151, %v175
  %177 = vdwg.mxu0
  %v178 = vtanh.pop %v176
  %179 = vrot.lane.b32.xlu0 %v149, 112
  %v180 = vpop.permute.xlu0 %179
  %182 = vst.msk [vmem:[%s8] sm:$0xff] %vm57, %v180
  %184 = vrot.lane.b32.xlu0 %v178, 32
  %v185 = vpop.permute.xlu0 %184
  %vm187 = vcmask 458112
  %188 = vst.msk [vmem:[%s8] sm:$0xff] %vm187, %v185
  %v189 = vmax.f32 %v176, 0.0
  %v190 = vld [vmem:[%s0] sm:$0xff]
  %192 = vrot.lane.b32.xlu0 %v189, 16
  %v193 = vpop.permute.xlu0 %192
  %v195 = vadd.f32 %v190, %v193
  %v196 = vmul.f32 %v195, 0.5
  %198 = vrot.lane.b32.xlu0 %v196, 40
  %v199 = vpop.permute.xlu0 %198
  %vm201 = vcmask 589248
  %202 = vst.msk [vmem:[%s8] sm:$0xff] %vm201, %v199
  %203 = vrot.lane.b32.xlu0 %v196, 112
  %v204 = vpop.permute.xlu0 %203
  %206 = vst.msk [vmem:[#allocation2] sm:$0xff] %vm50, %v204
  %207 = vst.msk [vmem:[#allocation2] sm:$0xff] %vm57, %v180
  %v208 = vld [vmem:[#allocation2] sm:$0xff]
  %v210 = vsel %vm63, %v208, 0
  %212 = vmatpush.msra.mxu0 0.0
  %213 = vmatpush.msra.mxu0 0.0
  %214 = vmatpush.msra.mxu0 0.0
  %215 = vmatpush.msra.mxu0 0.0
  %216 = vmatpush.msra.mxu0 0.0
  %217 = vmatpush.msra.mxu0 0.0
  %218 = vmatpush.msra.mxu0 0.0
  %219 = vmatpush.msra.mxu0 0.0
  %220 = vmatpush.msra.mxu0 0.0
  %221 = vmatpush.msra.mxu0 0.0
  %222 = vmatpush.msra.mxu0 %v34
  %223 = vmatpush.msra.mxu0 %v33
  %224 = vmatpush.msra.mxu0 %v32
  %225 = vmatpush.msra.mxu0 %v31
  %226 = vmatpush.msra.mxu0 %v30
  %227 = vmatpush.msra.mxu0 %v29
  %228 = vmatmul.f32.gmra.mxu0 %v210
  %v229 = vpop.f32.mrf.mxu0
  %v230 = vadd.f32 %v61, %v229
  %231 = vdwg.mxu0
  %232 = vmatpush.msra.mxu0 0.0
  %233 = vmatpush.msra.mxu0 0.0
  %234 = vmatpush.msra.mxu0 0.0
  %235 = vmatpush.msra.mxu0 0.0
  %236 = vmatpush.msra.mxu0 0.0
  %237 = vmatpush.msra.mxu0 0.0
  %238 = vmatpush.msra.mxu0 0.0
  %239 = vmatpush.msra.mxu0 0.0
  %240 = vmatpush.msra.mxu0 0.0
  %241 = vmatpush.msra.mxu0 0.0
  %242 = vmatpush.msra.mxu0 0.0
  %243 = vmatpush.msra.mxu0 0.0
  %244 = vmatpush.msra.mxu0 %v38
  %245 = vmatpush.msra.mxu0 %v37
  %246 = vmatpush.msra.mxu0 %v36
  %247 = vmatpush.msra.mxu0 %v35
  %248 = vmatmul.f32.gmra.mxu0 %v156
  %v249 = vpop.f32.mrf.mxu0
  %v250 = vadd.f32 %v88, %v249
  %251 = vdwg.mxu0
  %v252 = vxor.u32 %v230, 2147483648
  %v253 = vmul.f32 %v252, 1.442695
  %v254 = vpow.pop %v253
  %v255 = vadd.f32 %v254, 1.0
  %v256 = vrcp.pop %v255
  %v257 = vmul.f32 %v255, %v256
  %v258 = vsub.f32 1.0, %v257
  %v259 = vmul.f32 %v256, %v258
  %v260 = vadd.f32 %v256, %v259
  %vm261 = vweird.f32 %v255
  %vm262 = vweird.f32 %v256
  %vm263 = vmor %vm261, %vm262
  %v264 = vsel %vm263, %v256, %v260
  %v265 = vand.u32 2147483647, %v255
  %vm266 = vcmp.eq.f32.partialorder %v265, 8.507059e+37
  %v267 = vand.u32 %v255, 2147483648
  %v268 = vor.u32 1.1754944e-38, %v267
  %v269 = vsel %vm266, %v268, %v264
  %v270 = vmul.f32 1.0, %v269
  %v271 = vmul.f32 %v270, %v250
  %273 = vrot.lane.b32.xlu0 %v271, 64
  %v274 = vpop.permute.xlu0 %273
  %v276 = vadd.f32 %v230, %v274
  %v277 = vtanh.pop %v276
  %v278 = vsub.f32 1.0, %v270
  %280 = vrot.lane.b32.xlu0 %v277, 96
  %v281 = vpop.permute.xlu0 %280
  %v283 = vmul.f32 %v278, %v281
  %v284 = vmul.f32 %v270, %v149
  %v285 = vadd.f32 %v283, %v284
  %287 = vrot.lane.b32.xlu0 %v285, 96
  %v288 = vpop.permute.xlu0 %287
  %v289 = vsel %vm90, %v288, 0
  %291 = vmatpush.msra.mxu0 0.0
  %292 = vmatpush.msra.mxu0 0.0
  %293 = vmatpush.msra.mxu0 0.0
  %294 = vmatpush.msra.mxu0 0.0
  %295 = vmatpush.msra.mxu0 0.0
  %296 = vmatpush.msra.mxu0 0.0
  %297 = vmatpush.msra.mxu0 0.0
  %298 = vmatpush.msra.mxu0 0.0
  %299 = vmatpush.msra.mxu0 0.0
  %300 = vmatpush.msra.mxu0 0.0
  %301 = vmatpush.msra.mxu0 0.0
  %302 = vmatpush.msra.mxu0 0.0
  %303 = vmatpush.msra.mxu0 %v44
  %304 = vmatpush.msra.mxu0 %v43
  %305 = vmatpush.msra.mxu0 %v42
  %306 = vmatpush.msra.mxu0 %v41
  %307 = vmatmul.f32.gmra.mxu0 %v289
  %v308 = vpop.f32.mrf.mxu0
  %v309 = vadd.f32 %v151, %v308
  %310 = vdwg.mxu0
  %v311 = vtanh.pop %v309
  %312 = vrot.lane.b32.xlu0 %v285, 40
  %v313 = vpop.permute.xlu0 %312
  %vm315 = vcmask 851520
  %316 = vst.msk [vmem:[%s8] sm:$0xff] %vm315, %v313
  %318 = vrot.lane.b32.xlu0 %v311, 88
  %v319 = vpop.permute.xlu0 %318
  %vm321 = vcmask 917312
  %322 = vst.msk [vmem:[%s8] sm:$0xff] %vm321, %v319
  %v323 = vmax.f32 %v309, 0.0
  %v324 = vld [vmem:[%s0] sm:$0xff]
  %326 = vrot.lane.b32.xlu0 %v323, 32
  %v327 = vpop.permute.xlu0 %326
  %v329 = vadd.f32 %v324, %v327
  %v330 = vmul.f32 %v329, 0.5
  %332 = vrot.lane.b32.xlu0 %v330, 80
  %v333 = vpop.permute.xlu0 %332
  %vm335 = vcmask 1048448
  %336 = vst.msk [vmem:[%s8] sm:$0xff] %vm335, %v333
  %337 = vrot.lane.b32.xlu0 %v330, 96
  %v338 = vpop.permute.xlu0 %337
  %340 = vst.msk [vmem:[#allocation2] sm:$0xff] %vm50, %v338
  %341 = vrot.lane.b32.xlu0 %v285, 112
  %v342 = vpop.permute.xlu0 %341
  %344 = vst.msk [vmem:[#allocation2] sm:$0xff] %vm57, %v342
  %v345 = vld [vmem:[#allocation2] sm:$0xff]
  %v347 = vsel %vm63, %v345, 0
  %349 = vmatpush.msra.mxu0 0.0
  %350 = vmatpush.msra.mxu0 0.0
  %351 = vmatpush.msra.mxu0 0.0
  %352 = vmatpush.msra.mxu0 0.0
  %353 = vmatpush.msra.mxu0 0.0
  %354 = vmatpush.msra.mxu0 0.0
  %355 = vmatpush.msra.mxu0 0.0
  %356 = vmatpush.msra.mxu0 0.0
  %357 = vmatpush.msra.mxu0 0.0
  %358 = vmatpush.msra.mxu0 0.0
  %359 = vmatpush.msra.mxu0 %v34
  %360 = vmatpush.msra.mxu0 %v33
  %361 = vmatpush.msra.mxu0 %v32
  %362 = vmatpush.msra.mxu0 %v31
  %363 = vmatpush.msra.mxu0 %v30
  %364 = vmatpush.msra.mxu0 %v29
  %365 = vmatmul.f32.gmra.mxu0 %v347
  %v366 = vpop.f32.mrf.mxu0
  %v367 = vadd.f32 %v61, %v366
  %368 = vdwg.mxu0
  %369 = vmatpush.msra.mxu0 0.0
  %370 = vmatpush.msra.mxu0 0.0
  %371 = vmatpush.msra.mxu0 0.0
  %372 = vmatpush.msra.mxu0 0.0
  %373 = vmatpush.msra.mxu0 0.0
  %374 = vmatpush.msra.mxu0 0.0
  %375 = vmatpush.msra.mxu0 0.0
  %376 = vmatpush.msra.mxu0 0.0
  %377 = vmatpush.msra.mxu0 0.0
  %378 = vmatpush.msra.mxu0 0.0
  %379 = vmatpush.msra.mxu0 0.0
  %380 = vmatpush.msra.mxu0 0.0
  %381 = vmatpush.msra.mxu0 %v38
  %382 = vmatpush.msra.mxu0 %v37
  %383 = vmatpush.msra.mxu0 %v36
  %384 = vmatpush.msra.mxu0 %v35
  %385 = vmatmul.f32.gmra.mxu0 %v289
  %v386 = vpop.f32.mrf.mxu0
  %v387 = vadd.f32 %v88, %v386
  %388 = vdwg.mxu0
  %v389 = vxor.u32 %v367, 2147483648
  %v390 = vmul.f32 %v389, 1.442695
  %v391 = vpow.pop %v390
  %v392 = vadd.f32 %v391, 1.0
  %v393 = vrcp.pop %v392
  %v394 = vmul.f32 %v392, %v393
  %v395 = vsub.f32 1.0, %v394
  %v396 = vmul.f32 %v393, %v395
  %v397 = vadd.f32 %v393, %v396
  %vm398 = vweird.f32 %v392
  %vm399 = vweird.f32 %v393
  %vm400 = vmor %vm398, %vm399
  %v401 = vsel %vm400, %v393, %v397
  %v402 = vand.u32 2147483647, %v392
  %vm403 = vcmp.eq.f32.partialorder %v402, 8.507059e+37
  %v404 = vand.u32 %v392, 2147483648
  %v405 = vor.u32 1.1754944e-38, %v404
  %v406 = vsel %vm403, %v405, %v401
  %v407 = vmul.f32 1.0, %v406
  %v408 = vmul.f32 %v407, %v387
  %410 = vrot.lane.b32.xlu0 %v408, 64
  %v411 = vpop.permute.xlu0 %410
  %v413 = vadd.f32 %v367, %v411
  %v414 = vtanh.pop %v413
  %v415 = vsub.f32 1.0, %v407
  %417 = vrot.lane.b32.xlu0 %v414, 96
  %v418 = vpop.permute.xlu0 %417
  %v420 = vmul.f32 %v415, %v418
  %v421 = vmul.f32 %v407, %v285
  %v422 = vadd.f32 %v420, %v421
  %424 = vrot.lane.b32.xlu0 %v422, 96
  %v425 = vpop.permute.xlu0 %424
  %v426 = vsel %vm90, %v425, 0
  %428 = vmatpush.msra.mxu0 0.0
  %429 = vmatpush.msra.mxu0 0.0
  %430 = vmatpush.msra.mxu0 0.0
  %431 = vmatpush.msra.mxu0 0.0
  %432 = vmatpush.msra.mxu0 0.0
  %433 = vmatpush.msra.mxu0 0.0
  %434 = vmatpush.msra.mxu0 0.0
  %435 = vmatpush.msra.mxu0 0.0
  %436 = vmatpush.msra.mxu0 0.0
  %437 = vmatpush.msra.mxu0 0.0
  %438 = vmatpush.msra.mxu0 0.0
  %439 = vmatpush.msra.mxu0 0.0
  %440 = vmatpush.msra.mxu0 %v44
  %441 = vmatpush.msra.mxu0 %v43
  %442 = vmatpush.msra.mxu0 %v42
  %443 = vmatpush.msra.mxu0 %v41
  %444 = vmatmul.f32.gmra.mxu0 %v426
  %v445 = vpop.f32.mrf.mxu0
  %v446 = vadd.f32 %v151, %v445
  %447 = vdwg.mxu0
  %v448 = vtanh.pop %v446
  %450 = vst.msk [vmem:[%s8 + $0x8] sm:$0xff] %vm90, %v425
  %452 = vrot.lane.b32.xlu0 %v448, 16
  %v453 = vpop.permute.xlu0 %452
  %vm455 = vcmask 326912
  %456 = vst.msk [vmem:[%s8 + $0x8] sm:$0xff] %vm455, %v453
  %v457 = vmax.f32 %v446, 0.0
  %v458 = vld [vmem:[%s0] sm:$0xff]
  %460 = vrot.lane.b32.xlu0 %v457, 48
  %v461 = vpop.permute.xlu0 %460
  %v463 = vadd.f32 %v458, %v461
  %v464 = vmul.f32 %v463, 0.5
  %466 = vrot.lane.b32.xlu0 %v464, 120
  %v467 = vpop.permute.xlu0 %466
  %vm469 = vcmask 458048
  %470 = vst.msk [vmem:[%s8 + $0x8] sm:$0xff] %vm469, %v467
  %471 = vrot.lane.b32.xlu0 %v464, 80
  %v472 = vpop.permute.xlu0 %471
  %474 = vst.msk [vmem:[#allocation2] sm:$0xff] %vm50, %v472
  %475 = vrot.lane.b32.xlu0 %v422, 112
  %v476 = vpop.permute.xlu0 %475
  %478 = vst.msk [vmem:[#allocation2] sm:$0xff] %vm57, %v476
  %v479 = vld [vmem:[#allocation2] sm:$0xff]
  %v481 = vsel %vm63, %v479, 0
  %483 = vmatpush.msra.mxu0 0.0
  %484 = vmatpush.msra.mxu0 0.0
  %485 = vmatpush.msra.mxu0 0.0
  %486 = vmatpush.msra.mxu0 0.0
  %487 = vmatpush.msra.mxu0 0.0
  %488 = vmatpush.msra.mxu0 0.0
  %489 = vmatpush.msra.mxu0 0.0
  %490 = vmatpush.msra.mxu0 0.0
  %491 = vmatpush.msra.mxu0 0.0
  %492 = vmatpush.msra.mxu0 0.0
  %493 = vmatpush.msra.mxu0 %v34
  %494 = vmatpush.msra.mxu0 %v33
  %495 = vmatpush.msra.mxu0 %v32
  %496 = vmatpush.msra.mxu0 %v31
  %497 = vmatpush.msra.mxu0 %v30
  %498 = vmatpush.msra.mxu0 %v29
  %499 = vmatmul.f32.gmra.mxu0 %v481
  %v500 = vpop.f32.mrf.mxu0
  %v501 = vadd.f32 %v61, %v500
  %502 = vdwg.mxu0
  %503 = vmatpush.msra.mxu0 0.0
  %504 = vmatpush.msra.mxu0 0.0
  %505 = vmatpush.msra.mxu0 0.0
  %506 = vmatpush.msra.mxu0 0.0
  %507 = vmatpush.msra.mxu0 0.0
  %508 = vmatpush.msra.mxu0 0.0
  %509 = vmatpush.msra.mxu0 0.0
  %510 = vmatpush.msra.mxu0 0.0
  %511 = vmatpush.msra.mxu0 0.0
  %512 = vmatpush.msra.mxu0 0.0
  %513 = vmatpush.msra.mxu0 0.0
  %514 = vmatpush.msra.mxu0 0.0
  %515 = vmatpush.msra.mxu0 %v38
  %516 = vmatpush.msra.mxu0 %v37
  %517 = vmatpush.msra.mxu0 %v36
  %518 = vmatpush.msra.mxu0 %v35
  %519 = vmatmul.f32.gmra.mxu0 %v426
  %v520 = vpop.f32.mrf.mxu0
  %v521 = vadd.f32 %v88, %v520
  %522 = vdwg.mxu0
  %v523 = vxor.u32 %v501, 2147483648
  %v524 = vmul.f32 %v523, 1.442695
  %v525 = vpow.pop %v524
  %v526 = vadd.f32 %v525, 1.0
  %v527 = vrcp.pop %v526
  %v528 = vmul.f32 %v526, %v527
  %v529 = vsub.f32 1.0, %v528
  %v530 = vmul.f32 %v527, %v529
  %v531 = vadd.f32 %v527, %v530
  %vm532 = vweird.f32 %v526
  %vm533 = vweird.f32 %v527
  %vm534 = vmor %vm532, %vm533
  %v535 = vsel %vm534, %v527, %v531
  %v536 = vand.u32 2147483647, %v526
  %vm537 = vcmp.eq.f32.partialorder %v536, 8.507059e+37
  %v538 = vand.u32 %v526, 2147483648
  %v539 = vor.u32 1.1754944e-38, %v538
  %v540 = vsel %vm537, %v539, %v535
  %v541 = vmul.f32 1.0, %v540
  %v542 = vmul.f32 %v541, %v521
  %544 = vrot.lane.b32.xlu0 %v542, 64
  %v545 = vpop.permute.xlu0 %544
  %v547 = vadd.f32 %v501, %v545
  %v548 = vtanh.pop %v547
  %v549 = vsub.f32 1.0, %v541
  %551 = vrot.lane.b32.xlu0 %v548, 96
  %v552 = vpop.permute.xlu0 %551
  %v554 = vmul.f32 %v549, %v552
  %v555 = vmul.f32 %v541, %v422
  %v556 = vadd.f32 %v554, %v555
  %558 = vrot.lane.b32.xlu0 %v556, 96
  %v559 = vpop.permute.xlu0 %558
  %v560 = vsel %vm90, %v559, 0
  %562 = vmatpush.msra.mxu0 0.0
  %563 = vmatpush.msra.mxu0 0.0
  %564 = vmatpush.msra.mxu0 0.0
  %565 = vmatpush.msra.mxu0 0.0
  %566 = vmatpush.msra.mxu0 0.0
  %567 = vmatpush.msra.mxu0 0.0
  %568 = vmatpush.msra.mxu0 0.0
  %569 = vmatpush.msra.mxu0 0.0
  %570 = vmatpush.msra.mxu0 0.0
  %571 = vmatpush.msra.mxu0 0.0
  %572 = vmatpush.msra.mxu0 0.0
  %573 = vmatpush.msra.mxu0 0.0
  %574 = vmatpush.msra.mxu0 %v44
  %575 = vmatpush.msra.mxu0 %v43
  %576 = vmatpush.msra.mxu0 %v42
  %577 = vmatpush.msra.mxu0 %v41
  %578 = vmatmul.f32.gmra.mxu0 %v560
  %v579 = vpop.f32.mrf.mxu0
  %v580 = vadd.f32 %v151, %v579
  %581 = vdwg.mxu0
  %v582 = vtanh.pop %v580
  %583 = vrot.lane.b32.xlu0 %v556, 24
  %v584 = vpop.permute.xlu0 %583
  %vm586 = vcmask 720320
  %587 = vst.msk [vmem:[%s8 + $0x8] sm:$0xff] %vm586, %v584
  %589 = vrot.lane.b32.xlu0 %v582, 72
  %v590 = vpop.permute.xlu0 %589
  %vm592 = vcmask 786112
  %593 = vst.msk [vmem:[%s8 + $0x8] sm:$0xff] %vm592, %v590
  %v594 = vmax.f32 %v580, 0.0
  %v595 = vld [vmem:[%s0] sm:$0xff]
  %597 = vrot.lane.b32.xlu0 %v594, 64
  %v598 = vpop.permute.xlu0 %597
  %v600 = vadd.f32 %v595, %v598
  %v601 = vmul.f32 %v600, 0.5
  %603 = vrot.lane.b32.xlu0 %v601, 32
  %v604 = vpop.permute.xlu0 %603
  %vm606 = vcmask 917248
  %607 = vst.msk [vmem:[%s8 + $0x8] sm:$0xff] %vm606, %v604
  %608 = vrot.lane.b32.xlu0 %v601, 64
  %v609 = vpop.permute.xlu0 %608
  %611 = vst.msk [vmem:[#allocation2] sm:$0xff] %vm50, %v609
  %612 = vrot.lane.b32.xlu0 %v556, 112
  %v613 = vpop.permute.xlu0 %612
  %615 = vst.msk [vmem:[#allocation2] sm:$0xff] %vm57, %v613
  %v616 = vld [vmem:[#allocation2] sm:$0xff]
  %v618 = vsel %vm63, %v616, 0
  %620 = vmatpush.msra.mxu0 0.0
  %621 = vmatpush.msra.mxu0 0.0
  %622 = vmatpush.msra.mxu0 0.0
  %623 = vmatpush.msra.mxu0 0.0
  %624 = vmatpush.msra.mxu0 0.0
  %625 = vmatpush.msra.mxu0 0.0
  %626 = vmatpush.msra.mxu0 0.0
  %627 = vmatpush.msra.mxu0 0.0
  %628 = vmatpush.msra.mxu0 0.0
  %629 = vmatpush.msra.mxu0 0.0
  %630 = vmatpush.msra.mxu0 %v34
  %631 = vmatpush.msra.mxu0 %v33
  %632 = vmatpush.msra.mxu0 %v32
  %633 = vmatpush.msra.mxu0 %v31
  %634 = vmatpush.msra.mxu0 %v30
  %635 = vmatpush.msra.mxu0 %v29
  %636 = vmatmul.f32.gmra.mxu0 %v618
  %v637 = vpop.f32.mrf.mxu0
  %v638 = vadd.f32 %v61, %v637
  %639 = vdwg.mxu0
  %640 = vmatpush.msra.mxu0 0.0
  %641 = vmatpush.msra.mxu0 0.0
  %642 = vmatpush.msra.mxu0 0.0
  %643 = vmatpush.msra.mxu0 0.0
  %644 = vmatpush.msra.mxu0 0.0
  %645 = vmatpush.msra.mxu0 0.0
  %646 = vmatpush.msra.mxu0 0.0
  %647 = vmatpush.msra.mxu0 0.0
  %648 = vmatpush.msra.mxu0 0.0
  %649 = vmatpush.msra.mxu0 0.0
  %650 = vmatpush.msra.mxu0 0.0
  %651 = vmatpush.msra.mxu0 0.0
  %652 = vmatpush.msra.mxu0 %v38
  %653 = vmatpush.msra.mxu0 %v37
  %654 = vmatpush.msra.mxu0 %v36
  %655 = vmatpush.msra.mxu0 %v35
  %656 = vmatmul.f32.gmra.mxu0 %v560
  %v657 = vpop.f32.mrf.mxu0
  %v658 = vadd.f32 %v88, %v657
  %659 = vdwg.mxu0
  %v660 = vxor.u32 %v638, 2147483648
  %v661 = vmul.f32 %v660, 1.442695
  %v662 = vpow.pop %v661
  %v663 = vadd.f32 %v662, 1.0
  %v664 = vrcp.pop %v663
  %v665 = vmul.f32 %v663, %v664
  %v666 = vsub.f32 1.0, %v665
  %v667 = vmul.f32 %v664, %v666
  %v668 = vadd.f32 %v664, %v667
  %vm669 = vweird.f32 %v663
  %vm670 = vweird.f32 %v664
  %vm671 = vmor %vm669, %vm670
  %v672 = vsel %vm671, %v664, %v668
  %v673 = vand.u32 2147483647, %v663
  %vm674 = vcmp.eq.f32.partialorder %v673, 8.507059e+37
  %v675 = vand.u32 %v663, 2147483648
  %v676 = vor.u32 1.1754944e-38, %v675
  %v677 = vsel %vm674, %v676, %v672
  %v678 = vmul.f32 1.0, %v677
  %v679 = vmul.f32 %v678, %v658
  %681 = vrot.lane.b32.xlu0 %v679, 64
  %v682 = vpop.permute.xlu0 %681
  %v684 = vadd.f32 %v638, %v682
  %v685 = vtanh.pop %v684
  %v686 = vsub.f32 1.0, %v678
  %688 = vrot.lane.b32.xlu0 %v685, 96
  %v689 = vpop.permute.xlu0 %688
  %v691 = vmul.f32 %v686, %v689
  %v692 = vmul.f32 %v678, %v556
  %v693 = vadd.f32 %v691, %v692
  %695 = vrot.lane.b32.xlu0 %v693, 96
  %v696 = vpop.permute.xlu0 %695
  %v697 = vsel %vm90, %v696, 0
  %699 = vmatpush.msra.mxu0 0.0
  %700 = vmatpush.msra.mxu0 0.0
  %701 = vmatpush.msra.mxu0 0.0
  %702 = vmatpush.msra.mxu0 0.0
  %703 = vmatpush.msra.mxu0 0.0
  %704 = vmatpush.msra.mxu0 0.0
  %705 = vmatpush.msra.mxu0 0.0
  %706 = vmatpush.msra.mxu0 0.0
  %707 = vmatpush.msra.mxu0 0.0
  %708 = vmatpush.msra.mxu0 0.0
  %709 = vmatpush.msra.mxu0 0.0
  %710 = vmatpush.msra.mxu0 0.0
  %711 = vmatpush.msra.mxu0 %v44
  %712 = vmatpush.msra.mxu0 %v43
  %713 = vmatpush.msra.mxu0 %v42
  %714 = vmatpush.msra.mxu0 %v41
  %715 = vmatmul.f32.gmra.mxu0 %v697
  %v716 = vpop.f32.mrf.mxu0
  %v717 = vadd.f32 %v151, %v716
  %718 = vdwg.mxu0
  %v719 = vtanh.pop %v717
  %720 = vrot.lane.b32.xlu0 %v693, 80
  %v721 = vpop.permute.xlu0 %720
  %723 = vst.msk [vmem:[%s8 + $0x8] sm:$0xff] %vm335, %v721
  %724 = vst.msk [vmem:[%s8 + $0x10] sm:$0xff] %vm50, %v721
  %vm725 = vcmask 195712
  %726 = vst.msk [vmem:[%s8 + $0x10] sm:$0xff] %vm725, %v719
  %v727 = vmax.f32 %v717, 0.0
  %v728 = vld [vmem:[%s0] sm:$0xff]
  %730 = vrot.lane.b32.xlu0 %v727, 80
  %v731 = vpop.permute.xlu0 %730
  %v733 = vadd.f32 %v728, %v731
  %v734 = vmul.f32 %v733, 0.5
  %736 = vrot.lane.b32.xlu0 %v734, 72
  %v737 = vpop.permute.xlu0 %736
  %vm739 = vcmask 326848
  %740 = vst.msk [vmem:[%s8 + $0x10] sm:$0xff] %vm739, %v737
  %741 = vrot.lane.b32.xlu0 %v734, 48
  %v742 = vpop.permute.xlu0 %741
  %744 = vst.msk [vmem:[#allocation2] sm:$0xff] %vm50, %v742
  %745 = vrot.lane.b32.xlu0 %v693, 112
  %v746 = vpop.permute.xlu0 %745
  %748 = vst.msk [vmem:[#allocation2] sm:$0xff] %vm57, %v746
  %v749 = vld [vmem:[#allocation2] sm:$0xff]
  %v751 = vsel %vm63, %v749, 0
  %753 = vmatpush.msra.mxu0 0.0
  %754 = vmatpush.msra.mxu0 0.0
  %755 = vmatpush.msra.mxu0 0.0
  %756 = vmatpush.msra.mxu0 0.0
  %757 = vmatpush.msra.mxu0 0.0
  %758 = vmatpush.msra.mxu0 0.0
  %759 = vmatpush.msra.mxu0 0.0
  %760 = vmatpush.msra.mxu0 0.0
  %761 = vmatpush.msra.mxu0 0.0
  %762 = vmatpush.msra.mxu0 0.0
  %763 = vmatpush.msra.mxu0 %v34
  %764 = vmatpush.msra.mxu0 %v33
  %765 = vmatpush.msra.mxu0 %v32
  %766 = vmatpush.msra.mxu0 %v31
  %767 = vmatpush.msra.mxu0 %v30
  %768 = vmatpush.msra.mxu0 %v29
  %769 = vmatmul.f32.gmra.mxu0 %v751
  %v770 = vpop.f32.mrf.mxu0
  %v771 = vadd.f32 %v61, %v770
  %772 = vdwg.mxu0
  %773 = vmatpush.msra.mxu0 0.0
  %774 = vmatpush.msra.mxu0 0.0
  %775 = vmatpush.msra.mxu0 0.0
  %776 = vmatpush.msra.mxu0 0.0
  %777 = vmatpush.msra.mxu0 0.0
  %778 = vmatpush.msra.mxu0 0.0
  %779 = vmatpush.msra.mxu0 0.0
  %780 = vmatpush.msra.mxu0 0.0
  %781 = vmatpush.msra.mxu0 0.0
  %782 = vmatpush.msra.mxu0 0.0
  %783 = vmatpush.msra.mxu0 0.0
  %784 = vmatpush.msra.mxu0 0.0
  %785 = vmatpush.msra.mxu0 %v38
  %786 = vmatpush.msra.mxu0 %v37
  %787 = vmatpush.msra.mxu0 %v36
  %788 = vmatpush.msra.mxu0 %v35
  %789 = vmatmul.f32.gmra.mxu0 %v697
  %v790 = vpop.f32.mrf.mxu0
  %v791 = vadd.f32 %v88, %v790
  %792 = vdwg.mxu0
  %v793 = vxor.u32 %v771, 2147483648
  %v794 = vmul.f32 %v793, 1.442695
  %v795 = vpow.pop %v794
  %v796 = vadd.f32 %v795, 1.0
  %v797 = vrcp.pop %v796
  %v798 = vmul.f32 %v796, %v797
  %v799 = vsub.f32 1.0, %v798
  %v800 = vmul.f32 %v797, %v799
  %v801 = vadd.f32 %v797, %v800
  %vm802 = vweird.f32 %v796
  %vm803 = vweird.f32 %v797
  %vm804 = vmor %vm802, %vm803
  %v805 = vsel %vm804, %v797, %v801
  %v806 = vand.u32 2147483647, %v796
  %vm807 = vcmp.eq.f32.partialorder %v806, 8.507059e+37
  %v808 = vand.u32 %v796, 2147483648
  %v809 = vor.u32 1.1754944e-38, %v808
  %v810 = vsel %vm807, %v809, %v805
  %v811 = vmul.f32 1.0, %v810
  %v812 = vmul.f32 %v811, %v791
  %814 = vrot.lane.b32.xlu0 %v812, 64
  %v815 = vpop.permute.xlu0 %814
  %v817 = vadd.f32 %v771, %v815
  %v818 = vtanh.pop %v817
  %v819 = vsub.f32 1.0, %v811
  %821 = vrot.lane.b32.xlu0 %v818, 96
  %v822 = vpop.permute.xlu0 %821
  %v824 = vmul.f32 %v819, %v822
  %v825 = vmul.f32 %v811, %v693
  %v826 = vadd.f32 %v824, %v825
  %828 = vrot.lane.b32.xlu0 %v826, 96
  %v829 = vpop.permute.xlu0 %828
  %v830 = vsel %vm90, %v829, 0
  %832 = vmatpush.msra.mxu0 0.0
  %833 = vmatpush.msra.mxu0 0.0
  %834 = vmatpush.msra.mxu0 0.0
  %835 = vmatpush.msra.mxu0 0.0
  %836 = vmatpush.msra.mxu0 0.0
  %837 = vmatpush.msra.mxu0 0.0
  %838 = vmatpush.msra.mxu0 0.0
  %839 = vmatpush.msra.mxu0 0.0
  %840 = vmatpush.msra.mxu0 0.0
  %841 = vmatpush.msra.mxu0 0.0
  %842 = vmatpush.msra.mxu0 0.0
  %843 = vmatpush.msra.mxu0 0.0
  %844 = vmatpush.msra.mxu0 %v44
  %845 = vmatpush.msra.mxu0 %v43
  %846 = vmatpush.msra.mxu0 %v42
  %847 = vmatpush.msra.mxu0 %v41
  %848 = vmatmul.f32.gmra.mxu0 %v830
  %v849 = vpop.f32.mrf.mxu0
  %v850 = vadd.f32 %v151, %v849
  %851 = vdwg.mxu0
  %v852 = vtanh.pop %v850
  %853 = vrot.lane.b32.xlu0 %v826, 8
  %v854 = vpop.permute.xlu0 %853
  %vm856 = vcmask 589120
  %857 = vst.msk [vmem:[%s8 + $0x10] sm:$0xff] %vm856, %v854
  %859 = vrot.lane.b32.xlu0 %v852, 56
  %v860 = vpop.permute.xlu0 %859
  %vm862 = vcmask 654912
  %863 = vst.msk [vmem:[%s8 + $0x10] sm:$0xff] %vm862, %v860
  %v864 = vmax.f32 %v850, 0.0
  %v865 = vld [vmem:[%s0] sm:$0xff]
  %867 = vrot.lane.b32.xlu0 %v864, 96
  %v868 = vpop.permute.xlu0 %867
  %v870 = vadd.f32 %v865, %v868
  %v871 = vmul.f32 %v870, 0.5
  %873 = vrot.lane.b32.xlu0 %v871, 112
  %v874 = vpop.permute.xlu0 %873
  %vm876 = vcmask 786048
  %877 = vst.msk [vmem:[%s8 + $0x10] sm:$0xff] %vm876, %v874
  %878 = vrot.lane.b32.xlu0 %v871, 32
  %v879 = vpop.permute.xlu0 %878
  %881 = vst.msk [vmem:[#allocation2] sm:$0xff] %vm50, %v879
  %882 = vrot.lane.b32.xlu0 %v826, 112
  %v883 = vpop.permute.xlu0 %882
  %885 = vst.msk [vmem:[#allocation2] sm:$0xff] %vm57, %v883
  %v886 = vld [vmem:[#allocation2] sm:$0xff]
  %v888 = vsel %vm63, %v886, 0
  %890 = vmatpush.msra.mxu0 0.0
  %891 = vmatpush.msra.mxu0 0.0
  %892 = vmatpush.msra.mxu0 0.0
  %893 = vmatpush.msra.mxu0 0.0
  %894 = vmatpush.msra.mxu0 0.0
  %895 = vmatpush.msra.mxu0 0.0
  %896 = vmatpush.msra.mxu0 0.0
  %897 = vmatpush.msra.mxu0 0.0
  %898 = vmatpush.msra.mxu0 0.0
  %899 = vmatpush.msra.mxu0 0.0
  %900 = vmatpush.msra.mxu0 %v34
  %901 = vmatpush.msra.mxu0 %v33
  %902 = vmatpush.msra.mxu0 %v32
  %903 = vmatpush.msra.mxu0 %v31
  %904 = vmatpush.msra.mxu0 %v30
  %905 = vmatpush.msra.mxu0 %v29
  %906 = vmatmul.f32.gmra.mxu0 %v888
  %v907 = vpop.f32.mrf.mxu0
  %v908 = vadd.f32 %v61, %v907
  %909 = vdwg.mxu0
  %910 = vmatpush.msra.mxu0 0.0
  %911 = vmatpush.msra.mxu0 0.0
  %912 = vmatpush.msra.mxu0 0.0
  %913 = vmatpush.msra.mxu0 0.0
  %914 = vmatpush.msra.mxu0 0.0
  %915 = vmatpush.msra.mxu0 0.0
  %916 = vmatpush.msra.mxu0 0.0
  %917 = vmatpush.msra.mxu0 0.0
  %918 = vmatpush.msra.mxu0 0.0
  %919 = vmatpush.msra.mxu0 0.0
  %920 = vmatpush.msra.mxu0 0.0
  %921 = vmatpush.msra.mxu0 0.0
  %922 = vmatpush.msra.mxu0 %v38
  %923 = vmatpush.msra.mxu0 %v37
  %924 = vmatpush.msra.mxu0 %v36
  %925 = vmatpush.msra.mxu0 %v35
  %926 = vmatmul.f32.gmra.mxu0 %v830
  %v927 = vpop.f32.mrf.mxu0
  %v928 = vadd.f32 %v88, %v927
  %929 = vdwg.mxu0
  %v930 = vxor.u32 %v908, 2147483648
  %v931 = vmul.f32 %v930, 1.442695
  %v932 = vpow.pop %v931
  %v933 = vadd.f32 %v932, 1.0
  %v934 = vrcp.pop %v933
  %v935 = vmul.f32 %v933, %v934
  %v936 = vsub.f32 1.0, %v935
  %v937 = vmul.f32 %v934, %v936
  %v938 = vadd.f32 %v934, %v937
  %vm939 = vweird.f32 %v933
  %vm940 = vweird.f32 %v934
  %vm941 = vmor %vm939, %vm940
  %v942 = vsel %vm941, %v934, %v938
  %v943 = vand.u32 2147483647, %v933
  %vm944 = vcmp.eq.f32.partialorder %v943, 8.507059e+37
  %v945 = vand.u32 %v933, 2147483648
  %v946 = vor.u32 1.1754944e-38, %v945
  %v947 = vsel %vm944, %v946, %v942
  %v948 = vmul.f32 1.0, %v947
  %v949 = vmul.f32 %v948, %v928
  %951 = vrot.lane.b32.xlu0 %v949, 64
  %v952 = vpop.permute.xlu0 %951
  %v954 = vadd.f32 %v908, %v952
  %v955 = vtanh.pop %v954
  %v956 = vsub.f32 1.0, %v948
  %958 = vrot.lane.b32.xlu0 %v955, 96
  %v959 = vpop.permute.xlu0 %958
  %v961 = vmul.f32 %v956, %v959
  %v962 = vmul.f32 %v948, %v826
  %v963 = vadd.f32 %v961, %v962
  %965 = vrot.lane.b32.xlu0 %v963, 96
  %v966 = vpop.permute.xlu0 %965
  %v967 = vsel %vm90, %v966, 0
  %969 = vmatpush.msra.mxu0 0.0
  %970 = vmatpush.msra.mxu0 0.0
  %971 = vmatpush.msra.mxu0 0.0
  %972 = vmatpush.msra.mxu0 0.0
  %973 = vmatpush.msra.mxu0 0.0
  %974 = vmatpush.msra.mxu0 0.0
  %975 = vmatpush.msra.mxu0 0.0
  %976 = vmatpush.msra.mxu0 0.0
  %977 = vmatpush.msra.mxu0 0.0
  %978 = vmatpush.msra.mxu0 0.0
  %979 = vmatpush.msra.mxu0 0.0
  %980 = vmatpush.msra.mxu0 0.0
  %981 = vmatpush.msra.mxu0 %v44
  %982 = vmatpush.msra.mxu0 %v43
  %983 = vmatpush.msra.mxu0 %v42
  %984 = vmatpush.msra.mxu0 %v41
  %985 = vmatmul.f32.gmra.mxu0 %v967
  %v986 = vpop.f32.mrf.mxu0
  %v987 = vadd.f32 %v151, %v986
  %988 = vdwg.mxu0
  %v989 = vtanh.pop %v987
  %990 = vrot.lane.b32.xlu0 %v963, 64
  %v991 = vpop.permute.xlu0 %990
  %vm993 = vcmask 1048320
  %994 = vst.msk [vmem:[%s8 + $0x10] sm:$0xff] %vm993, %v991
  %996 = vrot.lane.b32.xlu0 %v989, 112
  %v997 = vpop.permute.xlu0 %996
  %vm999 = vcmask 64512
  %1000 = vst.msk [vmem:[%s8 + $0x18] sm:$0xff] %vm999, %v997
  %v1001 = vmax.f32 %v987, 0.0
  %v1002 = vld [vmem:[%s0] sm:$0xff]
  %1004 = vrot.lane.b32.xlu0 %v1001, 112
  %v1005 = vpop.permute.xlu0 %1004
  %v1007 = vadd.f32 %v1002, %v1005
  %v1008 = vmul.f32 %v1007, 0.5
  %1010 = vrot.lane.b32.xlu0 %v1008, 24
  %v1011 = vpop.permute.xlu0 %1010
  %vm1013 = vcmask 195648
  %1014 = vst.msk [vmem:[%s8 + $0x18] sm:$0xff] %vm1013, %v1011
  %1015 = vrot.lane.b32.xlu0 %v1008, 16
  %v1016 = vpop.permute.xlu0 %1015
  %1018 = vst.msk [vmem:[#allocation2] sm:$0xff] %vm50, %v1016
  %1019 = vrot.lane.b32.xlu0 %v963, 112
  %v1020 = vpop.permute.xlu0 %1019
  %1022 = vst.msk [vmem:[#allocation2] sm:$0xff] %vm57, %v1020
  %v1023 = vld [vmem:[#allocation2] sm:$0xff]
  %v1025 = vsel %vm63, %v1023, 0
  %1027 = vmatpush.msra.mxu0 0.0
  %1028 = vmatpush.msra.mxu0 0.0
  %1029 = vmatpush.msra.mxu0 0.0
  %1030 = vmatpush.msra.mxu0 0.0
  %1031 = vmatpush.msra.mxu0 0.0
  %1032 = vmatpush.msra.mxu0 0.0
  %1033 = vmatpush.msra.mxu0 0.0
  %1034 = vmatpush.msra.mxu0 0.0
  %1035 = vmatpush.msra.mxu0 0.0
  %1036 = vmatpush.msra.mxu0 0.0
  %1037 = vmatpush.msra.mxu0 %v34
  %1038 = vmatpush.msra.mxu0 %v33
  %1039 = vmatpush.msra.mxu0 %v32
  %1040 = vmatpush.msra.mxu0 %v31
  %1041 = vmatpush.msra.mxu0 %v30
  %1042 = vmatpush.msra.mxu0 %v29
  %1043 = vmatmul.f32.gmra.mxu0 %v1025
  %v1044 = vpop.f32.mrf.mxu0
  %v1045 = vadd.f32 %v61, %v1044
  %1046 = vdwg.mxu0
  %1047 = vmatpush.msra.mxu0 0.0
  %1048 = vmatpush.msra.mxu0 0.0
  %1049 = vmatpush.msra.mxu0 0.0
  %1050 = vmatpush.msra.mxu0 0.0
  %1051 = vmatpush.msra.mxu0 0.0
  %1052 = vmatpush.msra.mxu0 0.0
  %1053 = vmatpush.msra.mxu0 0.0
  %1054 = vmatpush.msra.mxu0 0.0
  %1055 = vmatpush.msra.mxu0 0.0
  %1056 = vmatpush.msra.mxu0 0.0
  %1057 = vmatpush.msra.mxu0 0.0
  %1058 = vmatpush.msra.mxu0 0.0
  %1059 = vmatpush.msra.mxu0 %v38
  %1060 = vmatpush.msra.mxu0 %v37
  %1061 = vmatpush.msra.mxu0 %v36
  %1062 = vmatpush.msra.mxu0 %v35
  %1063 = vmatmul.f32.gmra.mxu0 %v967
  %v1064 = vpop.f32.mrf.mxu0
  %v1065 = vadd.f32 %v88, %v1064
  %1066 = vdwg.mxu0
  %v1067 = vxor.u32 %v1045, 2147483648
  %v1068 = vmul.f32 %v1067, 1.442695
  %v1069 = vpow.pop %v1068
  %v1070 = vadd.f32 %v1069, 1.0
  %v1071 = vrcp.pop %v1070
  %v1072 = vmul.f32 %v1070, %v1071
  %v1073 = vsub.f32 1.0, %v1072
  %v1074 = vmul.f32 %v1071, %v1073
  %v1075 = vadd.f32 %v1071, %v1074
  %vm1076 = vweird.f32 %v1070
  %vm1077 = vweird.f32 %v1071
  %vm1078 = vmor %vm1076, %vm1077
  %v1079 = vsel %vm1078, %v1071, %v1075
  %v1080 = vand.u32 2147483647, %v1070
  %vm1081 = vcmp.eq.f32.partialorder %v1080, 8.507059e+37
  %v1082 = vand.u32 %v1070, 2147483648
  %v1083 = vor.u32 1.1754944e-38, %v1082
  %v1084 = vsel %vm1081, %v1083, %v1079
  %v1085 = vmul.f32 1.0, %v1084
  %v1086 = vmul.f32 %v1085, %v1065
  %1088 = vrot.lane.b32.xlu0 %v1086, 64
  %v1089 = vpop.permute.xlu0 %1088
  %v1091 = vadd.f32 %v1045, %v1089
  %v1092 = vtanh.pop %v1091
  %v1093 = vsub.f32 1.0, %v1085
  %1095 = vrot.lane.b32.xlu0 %v1092, 96
  %v1096 = vpop.permute.xlu0 %1095
  %v1098 = vmul.f32 %v1093, %v1096
  %v1099 = vmul.f32 %v1085, %v963
  %v1100 = vadd.f32 %v1098, %v1099
  %1102 = vrot.lane.b32.xlu0 %v1100, 96
  %v1103 = vpop.permute.xlu0 %1102
  %v1104 = vsel %vm90, %v1103, 0
  %1106 = vmatpush.msra.mxu0 0.0
  %1107 = vmatpush.msra.mxu0 0.0
  %1108 = vmatpush.msra.mxu0 0.0
  %1109 = vmatpush.msra.mxu0 0.0
  %1110 = vmatpush.msra.mxu0 0.0
  %1111 = vmatpush.msra.mxu0 0.0
  %1112 = vmatpush.msra.mxu0 0.0
  %1113 = vmatpush.msra.mxu0 0.0
  %1114 = vmatpush.msra.mxu0 0.0
  %1115 = vmatpush.msra.mxu0 0.0
  %1116 = vmatpush.msra.mxu0 0.0
  %1117 = vmatpush.msra.mxu0 0.0
  %1118 = vmatpush.msra.mxu0 %v44
  %1119 = vmatpush.msra.mxu0 %v43
  %1120 = vmatpush.msra.mxu0 %v42
  %1121 = vmatpush.msra.mxu0 %v41
  %1122 = vmatmul.f32.gmra.mxu0 %v1104
  %v1123 = vpop.f32.mrf.mxu0
  %v1124 = vadd.f32 %v151, %v1123
  %1125 = vdwg.mxu0
  %v1126 = vtanh.pop %v1124
  %1127 = vrot.lane.b32.xlu0 %v1100, 120
  %v1128 = vpop.permute.xlu0 %1127
  %vm1130 = vcmask 457920
  %1131 = vst.msk [vmem:[%s8 + $0x18] sm:$0xff] %vm1130, %v1128
  %1133 = vrot.lane.b32.xlu0 %v1126, 40
  %v1134 = vpop.permute.xlu0 %1133
  %vm1136 = vcmask 523712
  %1137 = vst.msk [vmem:[%s8 + $0x18] sm:$0xff] %vm1136, %v1134
  // Predicated region
  $region34: #{decoder_gru_forward.1} parent=0 // pred_check
    _
  $region35: #{decoder_gru_forward.1} parent=0 // pred_check_branch
    %1139 = sbr.rel (0) target = $region37
  $region36: #{decoder_gru_forward.1} parent=0 // pred_region
    _
  $region37: #{decoder_gru_forward.1} parent=0 // pred_fallthru
    _
  // Predicated region
  $region38: #{decoder_gru_forward.1} parent=0 // pred_check
    _
  $region39: #{decoder_gru_forward.1} parent=0 // pred_check_branch
    %1141 = sbr.rel (0) target = $region41
  $region40: #{decoder_gru_forward.1} parent=0 // pred_region
    _
  $region41: #{decoder_gru_forward.1} parent=0 // pred_fallthru
    _

</llo_original>
